<compile_context>
chip_gen: v7x
topology: tpu7x:2x2x1
jax: 0.10.0
libtpu: 0.0.40
codegen_flags: <defaults>
</compile_context>

<pallas_src>
import functools

import jax
import jax.numpy as jnp
from jax.experimental import pallas as pl
from jax.experimental.pallas import tpu as pltpu

BN_EPS = 1e-5


# ----------------------------------------------------------------------------
# Pallas kernels
# ----------------------------------------------------------------------------

def _mm_bn_kernel(x_ref, w_ref, s_ref, b_ref, o_ref, *, relu):
    """out = act((x @ W) * scale + bias)   -- conv (as matmul) + folded BN."""
    y = jnp.dot(x_ref[...], w_ref[...], preferred_element_type=jnp.float32)
    y = y * s_ref[...] + b_ref[...]
    if relu:
        y = jnp.maximum(y, 0.0)
    o_ref[...] = y


def _mm_bn_add_relu_kernel(x_ref, w_ref, s_ref, b_ref, r_ref, o_ref):
    """out = relu((x @ W) * scale + bias + residual)  -- bottleneck tail (identity)."""
    y = jnp.dot(x_ref[...], w_ref[...], preferred_element_type=jnp.float32)
    y = y * s_ref[...] + b_ref[...] + r_ref[...]
    o_ref[...] = jnp.maximum(y, 0.0)


def _mm_bn_proj_add_relu_kernel(x_ref, w_ref, s_ref, b_ref,
                                xs_ref, wd_ref, sd_ref, bd_ref, o_ref):
    """out = relu(conv3_bn(h) + downsample_bn(x))  -- bottleneck tail with projection."""
    y = jnp.dot(x_ref[...], w_ref[...], preferred_element_type=jnp.float32)
    y = y * s_ref[...] + b_ref[...]
    yd = jnp.dot(xs_ref[...], wd_ref[...], preferred_element_type=jnp.float32)
    yd = yd * sd_ref[...] + bd_ref[...]
    o_ref[...] = jnp.maximum(y + yd, 0.0)


def _maxpool9_kernel(x_ref, o_ref):
    """x_ref: (9, tm, C) stacked taps; o_ref: (tm, C) elementwise max."""
    m = x_ref[0]
    for t in range(1, 9):
        m = jnp.maximum(m, x_ref[t])
    o_ref[...] = m


# ----------------------------------------------------------------------------
# pallas_call wrappers
# ----------------------------------------------------------------------------

def _pick_tile(T, cap=1024):
    """Largest multiple-of-8 divisor of T not exceeding cap (or T itself)."""
    if T <= cap:
        return T
    for tm in range(cap, 7, -8):
        if T % tm == 0:
            return tm
    return T


def _const_spec(shape):
    return pl.BlockSpec(shape, lambda i, _s=len(shape): (0,) * _s)


def _compiler_params():
    return pltpu.CompilerParams(dimension_semantics=("parallel",))


def conv_bn(x, w, scale, bias, *, relu):
    """x: (T, K) f32, w: (K, N), scale/bias: (1, N).  Returns (T, N)."""
    T, K = x.shape
    N = w.shape[1]
    tm = _pick_tile(T)
    cost = pl.CostEstimate(
        flops=2 * T * K * N,
        transcendentals=0,
        bytes_accessed=4 * (T * K + K * N + T * N + 2 * N),
    )
    return pl.pallas_call(
        functools.partial(_mm_bn_kernel, relu=relu),
        out_shape=jax.ShapeDtypeStruct((T, N), jnp.float32),
        grid_spec=pltpu.PrefetchScalarGridSpec(
            num_scalar_prefetch=0,
            grid=(T // tm,),
            in_specs=[
                pl.BlockSpec((tm, K), lambda i: (i, 0)),
                _const_spec((K, N)),
                _const_spec((1, N)),
                _const_spec((1, N)),
            ],
            out_specs=pl.BlockSpec((tm, N), lambda i: (i, 0)),
        ),
        compiler_params=_compiler_params(),
        cost_estimate=cost,
    )(x, w, scale, bias)


def conv_bn_add_relu(x, w, scale, bias, res):
    """relu((x @ w) * scale + bias + res)."""
    T, K = x.shape
    N = w.shape[1]
    tm = _pick_tile(T)
    cost = pl.CostEstimate(
        flops=2 * T * K * N,
        transcendentals=0,
        bytes_accessed=4 * (T * K + K * N + 2 * T * N + 2 * N),
    )
    return pl.pallas_call(
        _mm_bn_add_relu_kernel,
        out_shape=jax.ShapeDtypeStruct((T, N), jnp.float32),
        grid_spec=pltpu.PrefetchScalarGridSpec(
            num_scalar_prefetch=0,
            grid=(T // tm,),
            in_specs=[
                pl.BlockSpec((tm, K), lambda i: (i, 0)),
                _const_spec((K, N)),
                _const_spec((1, N)),
                _const_spec((1, N)),
                pl.BlockSpec((tm, N), lambda i: (i, 0)),
            ],
            out_specs=pl.BlockSpec((tm, N), lambda i: (i, 0)),
        ),
        compiler_params=_compiler_params(),
        cost_estimate=cost,
    )(x, w, scale, bias, res)


def conv_bn_proj_add_relu(x, w, scale, bias, xs, wd, sd, bd):
    """relu((x @ w)*s + b + (xs @ wd)*sd + bd)  -- fused downsample projection."""
    T, K = x.shape
    N = w.shape[1]
    Kd = xs.shape[1]
    tm = _pick_tile(T)
    cost = pl.CostEstimate(
        flops=2 * T * N * (K + Kd),
        transcendentals=0,
        bytes_accessed=4 * (T * K + T * Kd + (K + Kd) * N + T * N + 4 * N),
    )
    return pl.pallas_call(
        _mm_bn_proj_add_relu_kernel,
        out_shape=jax.ShapeDtypeStruct((T, N), jnp.float32),
        grid_spec=pltpu.PrefetchScalarGridSpec(
            num_scalar_prefetch=0,
            grid=(T // tm,),
            in_specs=[
                pl.BlockSpec((tm, K), lambda i: (i, 0)),
                _const_spec((K, N)),
                _const_spec((1, N)),
                _const_spec((1, N)),
                pl.BlockSpec((tm, Kd), lambda i: (i, 0)),
                _const_spec((Kd, N)),
                _const_spec((1, N)),
                _const_spec((1, N)),
            ],
            out_specs=pl.BlockSpec((tm, N), lambda i: (i, 0)),
        ),
        compiler_params=_compiler_params(),
        cost_estimate=cost,
    )(x, w, scale, bias, xs, wd, sd, bd)


def maxpool_3x3_s2(x):
    """NHWC max-pool, kernel 3, stride 2, padding 1 (PyTorch MaxPool2d semantics)."""
    B, H, W, C = x.shape
    xp = jnp.pad(x, ((0, 0), (1, 1), (1, 1), (0, 0)), constant_values=-jnp.inf)
    Ho = (H + 2 - 3) // 2 + 1
    Wo = (W + 2 - 3) // 2 + 1
    taps = jnp.stack(
        [xp[:, dy:dy + 2 * Ho:2, dx:dx + 2 * Wo:2, :]
         for dy in range(3) for dx in range(3)],
        axis=0,
    ).reshape(9, B * Ho * Wo, C)
    T = B * Ho * Wo
    tm = _pick_tile(T)
    out = pl.pallas_call(
        _maxpool9_kernel,
        out_shape=jax.ShapeDtypeStruct((T, C), jnp.float32),
        grid_spec=pltpu.PrefetchScalarGridSpec(
            num_scalar_prefetch=0,
            grid=(T // tm,),
            in_specs=[pl.BlockSpec((9, tm, C), lambda i: (0, i, 0))],
            out_specs=pl.BlockSpec((tm, C), lambda i: (i, 0)),
        ),
        compiler_params=_compiler_params(),
    )(taps)
    return out.reshape(B, Ho, Wo, C)


# ----------------------------------------------------------------------------
# Wrapper-side layout plumbing (im2col taps), BN folding
# ----------------------------------------------------------------------------

def _im2col(x, ksize, stride, pad):
    """NHWC -> (B, Ho, Wo, k*k*C): taps concatenated along the contraction dim."""
    B, H, W, C = x.shape
    if pad:
        x = jnp.pad(x, ((0, 0), (pad, pad), (pad, pad), (0, 0)))
    Hp, Wp = x.shape[1], x.shape[2]
    Ho = (Hp - ksize) // stride + 1
    Wo = (Wp - ksize) // stride + 1
    cols = [x[:, dy:dy + stride * Ho:stride, dx:dx + stride * Wo:stride, :]
            for dy in range(ksize) for dx in range(ksize)]
    return jnp.concatenate(cols, axis=-1), Ho, Wo


def _fold_bn(bn):
    gamma, beta, mean, var = bn
    scale = gamma * jax.lax.rsqrt(var + BN_EPS)
    bias = beta - mean * scale
    return scale.reshape(1, -1), bias.reshape(1, -1)


# ----------------------------------------------------------------------------
# Backbone forward (Pallas)
# ----------------------------------------------------------------------------

def stem_forward(x_nhwc, p):
    taps, Ho, Wo = _im2col(x_nhwc, 7, 2, 3)
    B = x_nhwc.shape[0]
    T = B * Ho * Wo
    K = taps.shape[-1]
    s, b = _fold_bn(p["bn"])
    h = conv_bn(taps.reshape(T, K), p["w"].reshape(K, -1), s, b, relu=True)
    h = h.reshape(B, Ho, Wo, -1)
    return maxpool_3x3_s2(h)


def bottleneck_forward(x, p):
    B, H, W, Cin = x.shape
    stride = p["stride"]
    mid = p["w1"].shape[-1]
    Cout = p["w3"].shape[-1]

    s1, b1 = _fold_bn(p["bn1"])
    s2, b2 = _fold_bn(p["bn2"])
    s3, b3 = _fold_bn(p["bn3"])

    # conv1 (1x1) + BN + ReLU
    h = conv_bn(x.reshape(B * H * W, Cin), p["w1"].reshape(Cin, mid),
                s1, b1, relu=True).reshape(B, H, W, mid)

    # conv2 (3x3, stride) + BN + ReLU via im2col-on-K
    taps, Ho, Wo = _im2col(h, 3, stride, 1)
    T2 = B * Ho * Wo
    h2 = conv_bn(taps.reshape(T2, 9 * mid), p["w2"].reshape(9 * mid, mid),
                 s2, b2, relu=True)

    # conv3 (1x1) + BN + residual + ReLU, with fused downsample projection
    if "wd" in p:
        sd, bd = _fold_bn(p["bnd"])
        xs = x[:, ::stride, ::stride, :].reshape(T2, Cin)
        out = conv_bn_proj_add_relu(h2, p["w3"].reshape(mid, Cout), s3, b3,
                                    xs, p["wd"].reshape(Cin, Cout), sd, bd)
    else:
        out = conv_bn_add_relu(h2, p["w3"].reshape(mid, Cout), s3, b3,
                               x.reshape(T2, Cout))
    return out.reshape(B, Ho, Wo, Cout)


def backbone_forward_pallas(x_nchw, params):
    """x_nchw: (B, 3, H, W) f32.  Returns [c2, c3, c4, c5] as NCHW feature maps."""
    x = jnp.transpose(x_nchw, (0, 2, 3, 1))  # NHWC
    h = stem_forward(x, params["stem"])
    outs = []
    for name in ("layer2", "layer3", "layer4", "layer5"):
        for bp in params[name]:
            h = bottleneck_forward(h, bp)
        outs.append(jnp.transpose(h, (0, 3, 1, 2)))  # back to NCHW
    return outs


# ----------------------------------------------------------------------------
# Synthetic parameters (deterministic)
# ----------------------------------------------------------------------------

def _init_conv(key, k, cin, cout):
    fan_in = k * k * cin
    return jax.random.normal(key, (k, k, cin, cout), jnp.float32) * (2.0 / fan_in) ** 0.5


def _init_bn(key, c):
    k1, k2, k3, k4 = jax.random.split(key, 4)
    gamma = 1.0 + 0.1 * jax.random.normal(k1, (c,), jnp.float32)
    beta = 0.1 * jax.random.normal(k2, (c,), jnp.float32)
    mean = 0.1 * jax.random.normal(k3, (c,), jnp.float32)
    var = 1.0 + 0.1 * jax.random.uniform(k4, (c,), jnp.float32)
    return gamma, beta, mean, var


def init_bottleneck(key, cin, cout, stride, expansion=4):
    mid = cout // expansion
    ks = jax.random.split(key, 8)
    p = {
        "stride": stride,
        "w1": _init_conv(ks[0], 1, cin, mid), "bn1": _init_bn(ks[1], mid),
        "w2": _init_conv(ks[2], 3, mid, mid), "bn2": _init_bn(ks[3], mid),
        "w3": _init_conv(ks[4], 1, mid, cout), "bn3": _init_bn(ks[5], cout),
    }
    if stride != 1 or cin != cout:
        p["wd"] = _init_conv(ks[6], 1, cin, cout)
        p["bnd"] = _init_bn(ks[7], cout)
    return p


def init_backbone_params(key):
    keys = iter(jax.random.split(key, 32))
    params = {"stem": {"w": _init_conv(next(keys), 7, 3, 64),
                       "bn": _init_bn(next(keys), 64)}}

    def make_layer(cin, cout, n_blocks, stride):
        blocks, c, s = [], cin, stride
        for _ in range(n_blocks):
            blocks.append(init_bottleneck(next(keys), c, cout, s))
            c, s = cout, 1
        return blocks

    params["layer2"] = make_layer(64, 64, 3, 1)
    params["layer3"] = make_layer(64, 128, 4, 2)
    params["layer4"] = make_layer(128, 256, 6, 2)
    params["layer5"] = make_layer(256, 512, 3, 2)
    return params


# ----------------------------------------------------------------------------
# Pure-JAX reference (lax.conv / reduce_window) matching PyTorch eval semantics
# ----------------------------------------------------------------------------

def _conv_ref(x, w, stride, pad):
    return jax.lax.conv_general_dilated(
        x, w, window_strides=(stride, stride),
        padding=((pad, pad), (pad, pad)),
        dimension_numbers=("NHWC", "HWIO", "NHWC"),
        precision=jax.lax.Precision.HIGHEST)


def _bn_ref(x, bn):
    gamma, beta, mean, var = bn
    return (x - mean) * jax.lax.rsqrt(var + BN_EPS) * gamma + beta


def _bottleneck_ref(x, p):
    stride = p["stride"]
    h = jax.nn.relu(_bn_ref(_conv_ref(x, p["w1"], 1, 0), p["bn1"]))
    h = jax.nn.relu(_bn_ref(_conv_ref(h, p["w2"], stride, 1), p["bn2"]))
    h = _bn_ref(_conv_ref(h, p["w3"], 1, 0), p["bn3"])
    idn = _bn_ref(_conv_ref(x, p["wd"], stride, 0), p["bnd"]) if "wd" in p else x
    return jax.nn.relu(h + idn)


def backbone_forward_ref(x_nchw, params):
    x = jnp.transpose(x_nchw, (0, 2, 3, 1))
    p = params["stem"]
    h = jax.nn.relu(_bn_ref(_conv_ref(x, p["w"], 2, 3), p["bn"]))
    h = jax.lax.reduce_window(h, -jnp.inf, jax.lax.max,
                              (1, 3, 3, 1), (1, 2, 2, 1),
                              ((0, 0), (1, 1), (1, 1), (0, 0)))
    outs = []
    for name in ("layer2", "layer3", "layer4", "layer5"):
        for bp in params[name]:
            h = _bottleneck_ref(h, bp)
        outs.append(jnp.transpose(h, (0, 3, 1, 2)))
    return outs


# ----------------------------------------------------------------------------

if __name__ == "__main__":
    key = jax.random.PRNGKey(0)
    kx, kp = jax.random.split(key)
    x = jax.random.normal(kx, (2, 3, 64, 64), jnp.float32)  # NCHW, like PyTorch
    params = init_backbone_params(kp)

    outs = backbone_forward_pallas(x, params)
    outs = jax.block_until_ready(outs)

    refs = backbone_forward_ref(x, params)

    expected = [(2, 64, 16, 16), (2, 128, 8, 8), (2, 256, 4, 4), (2, 512, 2, 2)]
    for o, r, es in zip(outs, refs, expected):
        assert o.shape == es, (o.shape, es)
        assert jnp.allclose(o, r, atol=1e-2, rtol=1e-2), \
            float(jnp.max(jnp.abs(o - r)))

    print("KERNEL_OK")
</pallas_src>

<mosaic_0001>
module attributes {stable_mosaic.version = 11 : i64} {
  func.func @_mm_bn_kernel(%arg0: i32, %arg1: memref<1024x147xf32, #tpu.memory_space<vmem>>, %arg2: memref<147x64xf32, #tpu.memory_space<vmem>>, %arg3: memref<1x64xf32, #tpu.memory_space<vmem>>, %arg4: memref<1x64xf32, #tpu.memory_space<vmem>>, %arg5: memref<1024x64xf32, #tpu.memory_space<vmem>>) attributes {dimension_semantics = [#tpu.dimension_semantics<parallel>], iteration_bounds = array<i64: 2>, scalar_prefetch = 0 : i64, scratch_operands = 0 : i64, tpu.core_type = #tpu.core_type<tc>, window_params = [{transform_indices = @transform_0, window_bounds = array<i64: 1024, 147>}, {pipeline_mode = #tpu.pipeline_mode<synchronous>, transform_indices = @transform_1, window_bounds = array<i64: 147, 64>}, {pipeline_mode = #tpu.pipeline_mode<synchronous>, transform_indices = @transform_2, window_bounds = array<i64: 1, 64>}, {pipeline_mode = #tpu.pipeline_mode<synchronous>, transform_indices = @transform_3, window_bounds = array<i64: 1, 64>}, {transform_indices = @transform_4, window_bounds = array<i64: 1024, 64>}]} {
    %c0 = arith.constant 0 : index
    %c0_0 = arith.constant 0 : index
    %0 = vector.load %arg1[%c0, %c0_0] : memref<1024x147xf32, #tpu.memory_space<vmem>>, vector<1024x147xf32>
    %c0_1 = arith.constant 0 : index
    %c0_2 = arith.constant 0 : index
    %1 = vector.load %arg2[%c0_1, %c0_2] : memref<147x64xf32, #tpu.memory_space<vmem>>, vector<147x64xf32>
    %cst = arith.constant dense<0.000000e+00> : vector<1024x64xf32>
    %2 = tpu.matmul %0, %1, %cst {dimension_numbers = #tpu.dot_dimension_numbers<[1], [0], [0], [1], [0, 0, 1, 1], [], []>} : vector<1024x147xf32>, vector<147x64xf32>, vector<1024x64xf32> -> vector<1024x64xf32>
    %c0_3 = arith.constant 0 : index
    %c0_4 = arith.constant 0 : index
    %3 = vector.load %arg3[%c0_3, %c0_4] : memref<1x64xf32, #tpu.memory_space<vmem>>, vector<1x64xf32>
    %4 = vector.broadcast %3 : vector<1x64xf32> to vector<1024x64xf32>
    %5 = arith.mulf %2, %4 : vector<1024x64xf32>
    %c0_5 = arith.constant 0 : index
    %c0_6 = arith.constant 0 : index
    %6 = vector.load %arg4[%c0_5, %c0_6] : memref<1x64xf32, #tpu.memory_space<vmem>>, vector<1x64xf32>
    %7 = vector.broadcast %6 : vector<1x64xf32> to vector<1024x64xf32>
    %8 = arith.addf %5, %7 : vector<1024x64xf32>
    %cst_7 = arith.constant 0.000000e+00 : f32
    %9 = vector.broadcast %cst_7 : f32 to vector<1024x64xf32>
    %10 = arith.maximumf %8, %9 : vector<1024x64xf32>
    %c0_8 = arith.constant 0 : index
    %c0_9 = arith.constant 0 : index
    %11 = vector.load %arg5[%c0_8, %c0_9] : memref<1024x64xf32, #tpu.memory_space<vmem>>, vector<1024x64xf32>
    tpu.vector_store %arg5[%c0_8, %c0_9], %10 {strides = array<i32>} : memref<1024x64xf32, #tpu.memory_space<vmem>>, vector<1024x64xf32>,
    return
  }
  func.func @transform_0(%arg0: i32) -> (i32, i32) {
    %c0_i32 = arith.constant 0 : i32
    %c0_i32_0 = arith.constant 0 : i32
    return %arg0, %c0_i32 : i32, i32
  }
  func.func @transform_1(%arg0: i32) -> (i32, i32) {
    %c0_i32 = arith.constant 0 : i32
    %c0_i32_0 = arith.constant 0 : i32
    %c0_i32_1 = arith.constant 0 : i32
    return %c0_i32, %c0_i32_0 : i32, i32
  }
  func.func @transform_2(%arg0: i32) -> (i32, i32) {
    %c0_i32 = arith.constant 0 : i32
    %c0_i32_0 = arith.constant 0 : i32
    %c0_i32_1 = arith.constant 0 : i32
    return %c0_i32, %c0_i32_0 : i32, i32
  }
  func.func @transform_3(%arg0: i32) -> (i32, i32) {
    %c0_i32 = arith.constant 0 : i32
    %c0_i32_0 = arith.constant 0 : i32
    %c0_i32_1 = arith.constant 0 : i32
    return %c0_i32, %c0_i32_0 : i32, i32
  }
  func.func @transform_4(%arg0: i32) -> (i32, i32) {
    %c0_i32 = arith.constant 0 : i32
    %c0_i32_0 = arith.constant 0 : i32
    return %arg0, %c0_i32 : i32, i32
  }
}

</mosaic_0001>

<llo_original>
// kernel: tpu_custom_call.1
$region0: #{tpu_custom_call.1}
  #allocation0 [shape = 'u32[]', space=smem, size = 0x4, offset = 0x4, fixed_abs, tag = 'smem constant byte address 0x4 - core index']
  #allocation1 [shape = 'u32[144,128]{1,0:T(1,128)}', space=vmem, size = 0x12000, scoped, tag = 'internal scratch']
  %s0 = inlined_call_operand.vmem [shape: f32[2048,147], index: 0, kind: input, shape index: {}]
  %s1 = inlined_call_operand.vmem [shape: f32[147,64], index: 1, kind: input, shape index: {}]
  %s2 = inlined_call_operand.vmem [shape: f32[1,64], index: 2, kind: input, shape index: {}]
  %s3 = inlined_call_operand.vmem [shape: f32[1,64], index: 3, kind: input, shape index: {}]
  %s4 = inlined_call_operand.vmem [shape: f32[2048,64], index: 4, kind: output, shape index: {}]
  %s5 = sld [smem:[#allocation0]]
  $region49: #{tpu_custom_call.1} parent=0
    _
  %s7 = ssub.s32 1, %s5
  %s8 = scalar_select 0, %s7, %s5
  loop: start=0, step=1, limit=4
  $region2: #{tpu_custom_call.1} parent=0 // loop_pre_header
    _
  $region3: #{tpu_custom_call.1} parent=0 // loop_header
    %s10 = sphi 0, %s14
    %p11 = scmp.ge.s32.totalorder %s10, 4
    %s20 = sphi 0, %s22
    %s23 = sphi 0, %s20
    %s24 = sphi 0, %s23
    %s40 = sphi 0, %s24
    %s44 = sphi 0, %s44
    %s46 = sphi 0, %s44
    %s47 = sphi 0, %s46
    %s61 = sphi 0, %s47
    %s65 = sphi 0, %s65
    %s67 = sphi 0, %s65
    %s68 = sphi 0, %s67
    %s82 = sphi 0, %s68
    %s86 = sphi 0, %s86
    %s88 = sphi 0, %s86
    %s89 = sphi 0, %s88
    %s103 = sphi 0, %s89
    %s109 = sphi 0, %s111
    %s112 = sphi 0, %s109
    %s113 = sphi 0, %s112
    %s129 = sphi 0, %s113
  $region4: #{tpu_custom_call.1} parent=0 // loop_header_branch
    %13 = sbr.rel (%p11) target = $region8
  $region5: #{tpu_custom_call.1} parent=0 // loop_body
    %s15 = ssub.s32 %s10, 1
    %s16 = ssub.s32 %s10, 2
    %s17 = sadd.s32 %s10, 1
    %s18 = ssub.s32 %s10, %s17
    %p19 = scmp.eq.s32.totalorder %s18, 0
    %s21 = sadd.s32 %s20, 1
    %s22 = scalar_select %p19, %s20, %s21
    %p25 = pneg %p19
    %p26 = scmp.eq.s32.totalorder %s10, 1
    %p27 = por %p25, %p26
    %p28 = scmp.ne.s32.totalorder %s20, %s23
    %p29 = scmp.eq.s32.totalorder %s10, 0
    %p30 = por %p28, %p29
    %p31 = scmp.ne.s32.totalorder %s20, %s23
    %p32 = scmp.eq.s32.totalorder %s15, 1
    %p33 = por %p31, %p32
    %p34 = scmp.ne.s32.totalorder %s23, %s24
    %p35 = scmp.eq.s32.totalorder %s15, 0
    %p36 = por %p34, %p35
    %p37 = scmp.ne.s32.totalorder %s23, %s24
    %p38 = scmp.eq.s32.totalorder %s16, 1
    %p39 = por %p37, %p38
    %p41 = scmp.ne.s32.totalorder %s24, %s40
    %p42 = scmp.eq.s32.totalorder %s16, 0
    %p43 = por %p41, %p42
    %s45 = sadd.s32 %s44, 1
    %p48 = scmp.eq.s32.totalorder %s10, 1
    %p49 = scmp.ne.s32.totalorder %s44, %s46
    %p50 = scmp.eq.s32.totalorder %s10, 0
    %p51 = por %p49, %p50
    %p52 = scmp.ne.s32.totalorder %s44, %s46
    %p53 = scmp.eq.s32.totalorder %s15, 1
    %p54 = por %p52, %p53
    %p55 = scmp.ne.s32.totalorder %s46, %s47
    %p56 = scmp.eq.s32.totalorder %s15, 0
    %p57 = por %p55, %p56
    %p58 = scmp.ne.s32.totalorder %s46, %s47
    %p59 = scmp.eq.s32.totalorder %s16, 1
    %p60 = por %p58, %p59
    %p62 = scmp.ne.s32.totalorder %s47, %s61
    %p63 = scmp.eq.s32.totalorder %s16, 0
    %p64 = por %p62, %p63
    %s66 = sadd.s32 %s65, 1
    %p69 = scmp.eq.s32.totalorder %s10, 1
    %p70 = scmp.ne.s32.totalorder %s65, %s67
    %p71 = scmp.eq.s32.totalorder %s10, 0
    %p72 = por %p70, %p71
    %p73 = scmp.ne.s32.totalorder %s65, %s67
    %p74 = scmp.eq.s32.totalorder %s15, 1
    %p75 = por %p73, %p74
    %p76 = scmp.ne.s32.totalorder %s67, %s68
    %p77 = scmp.eq.s32.totalorder %s15, 0
    %p78 = por %p76, %p77
    %p79 = scmp.ne.s32.totalorder %s67, %s68
    %p80 = scmp.eq.s32.totalorder %s16, 1
    %p81 = por %p79, %p80
    %p83 = scmp.ne.s32.totalorder %s68, %s82
    %p84 = scmp.eq.s32.totalorder %s16, 0
    %p85 = por %p83, %p84
    %s87 = sadd.s32 %s86, 1
    %p90 = scmp.eq.s32.totalorder %s10, 1
    %p91 = scmp.ne.s32.totalorder %s86, %s88
    %p92 = scmp.eq.s32.totalorder %s10, 0
    %p93 = por %p91, %p92
    %p94 = scmp.ne.s32.totalorder %s86, %s88
    %p95 = scmp.eq.s32.totalorder %s15, 1
    %p96 = por %p94, %p95
    %p97 = scmp.ne.s32.totalorder %s88, %s89
    %p98 = scmp.eq.s32.totalorder %s15, 0
    %p99 = por %p97, %p98
    %p100 = scmp.ne.s32.totalorder %s88, %s89
    %p101 = scmp.eq.s32.totalorder %s16, 1
    %p102 = por %p100, %p101
    %p104 = scmp.ne.s32.totalorder %s89, %s103
    %p105 = scmp.eq.s32.totalorder %s16, 0
    %p106 = por %p104, %p105
    %s107 = ssub.s32 %s10, %s17
    %p108 = scmp.eq.s32.totalorder %s107, 0
    %s110 = sadd.s32 %s109, 1
    %s111 = scalar_select %p108, %s109, %s110
    %p114 = pneg %p108
    %p115 = scmp.eq.s32.totalorder %s10, 1
    %p116 = por %p114, %p115
    %p117 = scmp.ne.s32.totalorder %s109, %s112
    %p118 = scmp.eq.s32.totalorder %s10, 0
    %p119 = por %p117, %p118
    %p120 = scmp.ne.s32.totalorder %s109, %s112
    %p121 = scmp.eq.s32.totalorder %s15, 1
    %p122 = por %p120, %p121
    %p123 = scmp.ne.s32.totalorder %s112, %s113
    %p124 = scmp.eq.s32.totalorder %s15, 0
    %p125 = por %p123, %p124
    %p126 = scmp.ne.s32.totalorder %s112, %s113
    %p127 = scmp.eq.s32.totalorder %s16, 1
    %p128 = por %p126, %p127
    %p130 = scmp.ne.s32.totalorder %s113, %s129
    %p131 = scmp.eq.s32.totalorder %s16, 0
    %p132 = por %p130, %p131
    %p133 = scmp.le.s32.totalorder 1, %s10
    %p134 = scmp.lt.s32.totalorder %s10, 3
    %p135 = pnand %p133, %p134
    %p136 = pneg %p135
    // Predicated region
    $region9: #{tpu_custom_call.1} parent=5 // pred_check
      _
    $region10: #{tpu_custom_call.1} parent=5 // pred_check_branch
      %138 = sbr.rel (%p135) target = $region12
    $region11: #{tpu_custom_call.1} parent=5 // pred_region
      %s139 = ssub.s32 %s10, 1
      // Predicated region
      $region13: #{tpu_custom_call.1} parent=11 // pred_check
        %p140 = pneg %p57
      $region14: #{tpu_custom_call.1} parent=11 // pred_check_branch
        %142 = sbr.rel (%p140) target = $region16
      $region15: #{tpu_custom_call.1} parent=11 // pred_region
        _
      $region16: #{tpu_custom_call.1} parent=11 // pred_fallthru
        _
      // Predicated region
      $region17: #{tpu_custom_call.1} parent=11 // pred_check
        %p143 = pneg %p78
      $region18: #{tpu_custom_call.1} parent=11 // pred_check_branch
        %145 = sbr.rel (%p143) target = $region20
      $region19: #{tpu_custom_call.1} parent=11 // pred_region
        _
      $region20: #{tpu_custom_call.1} parent=11 // pred_fallthru
        _
      // Predicated region
      $region21: #{tpu_custom_call.1} parent=11 // pred_check
        %p146 = pneg %p99
      $region22: #{tpu_custom_call.1} parent=11 // pred_check_branch
        %148 = sbr.rel (%p146) target = $region24
      $region23: #{tpu_custom_call.1} parent=11 // pred_region
        _
      $region24: #{tpu_custom_call.1} parent=11 // pred_fallthru
        _
    $region12: #{tpu_custom_call.1} parent=5 // pred_fallthru
      _
    %p149 = scmp.lt.s32.totalorder %s10, 2
    // Predicated region
    $region25: #{tpu_custom_call.1} parent=5 // pred_check
      %p150 = pneg %p149
    $region26: #{tpu_custom_call.1} parent=5 // pred_check_branch
      %152 = sbr.rel (%p150) target = $region28
    $region27: #{tpu_custom_call.1} parent=5 // pred_region
      // Predicated region
      $region29: #{tpu_custom_call.1} parent=27 // pred_check
        %p153 = pneg %p30
      $region30: #{tpu_custom_call.1} parent=27 // pred_check_branch
        %155 = sbr.rel (%p153) target = $region32
      $region31: #{tpu_custom_call.1} parent=27 // pred_region
        %s156 = smul.u32 128, %s10
        %p157 = scmp.lt.s32.totalorder %s156, 255
        %s158 = scalar_select %p157, %s156, 255
        %s159 = smul.addr %s158, 2
        %s160 = smul.addr %s159, 8
        %s161 = scalar_lea.vmem %s0, %s160
        %s162 = smul.u32 128, %s10
      $region32: #{tpu_custom_call.1} parent=27 // pred_fallthru
        _
    $region28: #{tpu_custom_call.1} parent=5 // pred_fallthru
      _
    %p163 = scmp.le.s32.totalorder 1, %s10
    %p164 = scmp.lt.s32.totalorder %s10, 3
    %p165 = pnand %p163, %p164
    %p166 = pneg %p165
    // Predicated region
    $region33: #{tpu_custom_call.1} parent=5 // pred_check
      _
    $region34: #{tpu_custom_call.1} parent=5 // pred_check_branch
      %168 = sbr.rel (%p165) target = $region36
    $region35: #{tpu_custom_call.1} parent=5 // pred_region
      %s169 = ssub.s32 %s10, 1
      %s170 = smul.u32 128, %s15
      %p171 = scmp.lt.s32.totalorder %s170, 255
      %s172 = scalar_select %p171, %s170, 255
      %s173 = smul.addr %s172, 2
      %s174 = smul.addr %s173, 8
      %s175 = scalar_lea.vmem %s0, %s174
      %p176 = pneg %p36
      %p177 = pneg %p33
      %p178 = pneg %p57
      %p179 = pneg %p54
      %p180 = pneg %p78
      %p181 = pneg %p75
      %p182 = pneg %p99
      %p183 = pneg %p96
      %p184 = pneg %p125
      %p185 = pneg %p122
      %s186 = smul.u32 128, %s15
      %p187 = scmp.lt.s32.totalorder %s186, 255
      %s188 = scalar_select %p187, %s186, 255
      %s189 = smul.addr %s188, 8
      %s190 = scalar_lea.vmem %s4, %s189
      %s191 = smul.u32 128, %s15
      %p192 = scmp.lt.s32.totalorder %s191, 255
      %s193 = scalar_select %p192, %s191, 255
      %s194 = smul.addr %s193, 2
      %s195 = smul.addr %s194, 8
      %s196 = scalar_lea.vmem %s0, %s195
      %s197 = smul.u32 128, %s15
      %s198 = smul.u32 128, %s15
      %p199 = scmp.lt.s32.totalorder %s198, 255
      %s200 = scalar_select %p199, %s198, 255
      %s201 = smul.addr %s200, 8
      %s202 = scalar_lea.vmem %s4, %s201
      %s203 = smul.u32 128, %s15
      %v204 = vld [vmem:[%s196] sm:$0xff]
      %v205 = vld [vmem:[%s196 + $0x8] sm:$0xff]
      %v206 = vld [vmem:[%s196 + $0x10] sm:$0xff]
      %v207 = vld [vmem:[%s196 + $0x18] sm:$0xff]
      %v208 = vld [vmem:[%s196 + $0x20] sm:$0xff]
      %v209 = vld [vmem:[%s196 + $0x28] sm:$0xff]
      %v210 = vld [vmem:[%s196 + $0x30] sm:$0xff]
      %v211 = vld [vmem:[%s196 + $0x38] sm:$0xff]
      %v212 = vld [vmem:[%s196 + $0x40] sm:$0xff]
      %v213 = vld [vmem:[%s196 + $0x48] sm:$0xff]
      %v214 = vld [vmem:[%s196 + $0x50] sm:$0xff]
      %v215 = vld [vmem:[%s196 + $0x58] sm:$0xff]
      %v216 = vld [vmem:[%s196 + $0x60] sm:$0xff]
      %v217 = vld [vmem:[%s196 + $0x68] sm:$0xff]
      %v218 = vld [vmem:[%s196 + $0x70] sm:$0xff]
      %v219 = vld [vmem:[%s196 + $0x78] sm:$0xff]
      %v220 = vld [vmem:[%s196 + $0x80] sm:$0xff]
      %v221 = vld [vmem:[%s196 + $0x88] sm:$0xff]
      %v222 = vld [vmem:[%s196 + $0x90] sm:$0xff]
      %v223 = vld [vmem:[%s196 + $0x98] sm:$0xff]
      %v224 = vld [vmem:[%s196 + $0xa0] sm:$0xff]
      %v225 = vld [vmem:[%s196 + $0xa8] sm:$0xff]
      %v226 = vld [vmem:[%s196 + $0xb0] sm:$0xff]
      %v227 = vld [vmem:[%s196 + $0xb8] sm:$0xff]
      %v228 = vld [vmem:[%s196 + $0xc0] sm:$0xff]
      %v229 = vld [vmem:[%s196 + $0xc8] sm:$0xff]
      %v230 = vld [vmem:[%s196 + $0xd0] sm:$0xff]
      %v231 = vld [vmem:[%s196 + $0xd8] sm:$0xff]
      %v232 = vld [vmem:[%s196 + $0xe0] sm:$0xff]
      %v233 = vld [vmem:[%s196 + $0xe8] sm:$0xff]
      %v234 = vld [vmem:[%s196 + $0xf0] sm:$0xff]
      %v235 = vld [vmem:[%s196 + $0xf8] sm:$0xff]
      %v236 = vld [vmem:[%s196 + $0x100] sm:$0xff]
      %v237 = vld [vmem:[%s196 + $0x108] sm:$0xff]
      %v238 = vld [vmem:[%s196 + $0x110] sm:$0xff]
      %v239 = vld [vmem:[%s196 + $0x118] sm:$0xff]
      %v240 = vld [vmem:[%s196 + $0x120] sm:$0xff]
      %v241 = vld [vmem:[%s196 + $0x128] sm:$0xff]
      %v242 = vld [vmem:[%s196 + $0x130] sm:$0xff]
      %v243 = vld [vmem:[%s196 + $0x138] sm:$0xff]
      %v244 = vld [vmem:[%s196 + $0x140] sm:$0xff]
      %v245 = vld [vmem:[%s196 + $0x148] sm:$0xff]
      %v246 = vld [vmem:[%s196 + $0x150] sm:$0xff]
      %v247 = vld [vmem:[%s196 + $0x158] sm:$0xff]
      %v248 = vld [vmem:[%s196 + $0x160] sm:$0xff]
      %v249 = vld [vmem:[%s196 + $0x168] sm:$0xff]
      %v250 = vld [vmem:[%s196 + $0x170] sm:$0xff]
      %v251 = vld [vmem:[%s196 + $0x178] sm:$0xff]
      %v252 = vld [vmem:[%s196 + $0x180] sm:$0xff]
      %v253 = vld [vmem:[%s196 + $0x188] sm:$0xff]
      %v254 = vld [vmem:[%s196 + $0x190] sm:$0xff]
      %v255 = vld [vmem:[%s196 + $0x198] sm:$0xff]
      %v256 = vld [vmem:[%s196 + $0x1a0] sm:$0xff]
      %v257 = vld [vmem:[%s196 + $0x1a8] sm:$0xff]
      %v258 = vld [vmem:[%s196 + $0x1b0] sm:$0xff]
      %v259 = vld [vmem:[%s196 + $0x1b8] sm:$0xff]
      %v260 = vld [vmem:[%s196 + $0x1c0] sm:$0xff]
      %v261 = vld [vmem:[%s196 + $0x1c8] sm:$0xff]
      %v262 = vld [vmem:[%s196 + $0x1d0] sm:$0xff]
      %v263 = vld [vmem:[%s196 + $0x1d8] sm:$0xff]
      %v264 = vld [vmem:[%s196 + $0x1e0] sm:$0xff]
      %v265 = vld [vmem:[%s196 + $0x1e8] sm:$0xff]
      %v266 = vld [vmem:[%s196 + $0x1f0] sm:$0xff]
      %v267 = vld [vmem:[%s196 + $0x1f8] sm:$0xff]
      %v268 = vld [vmem:[%s196 + $0x200] sm:$0xff]
      %v269 = vld [vmem:[%s196 + $0x208] sm:$0xff]
      %v270 = vld [vmem:[%s196 + $0x210] sm:$0xff]
      %v271 = vld [vmem:[%s196 + $0x218] sm:$0xff]
      %v272 = vld [vmem:[%s196 + $0x220] sm:$0xff]
      %v273 = vld [vmem:[%s196 + $0x228] sm:$0xff]
      %v274 = vld [vmem:[%s196 + $0x230] sm:$0xff]
      %v275 = vld [vmem:[%s196 + $0x238] sm:$0xff]
      %v276 = vld [vmem:[%s196 + $0x240] sm:$0xff]
      %v277 = vld [vmem:[%s196 + $0x248] sm:$0xff]
      %v278 = vld [vmem:[%s196 + $0x250] sm:$0xff]
      %v279 = vld [vmem:[%s196 + $0x258] sm:$0xff]
      %v280 = vld [vmem:[%s196 + $0x260] sm:$0xff]
      %v281 = vld [vmem:[%s196 + $0x268] sm:$0xff]
      %v282 = vld [vmem:[%s196 + $0x270] sm:$0xff]
      %v283 = vld [vmem:[%s196 + $0x278] sm:$0xff]
      %v284 = vld [vmem:[%s196 + $0x280] sm:$0xff]
      %v285 = vld [vmem:[%s196 + $0x288] sm:$0xff]
      %v286 = vld [vmem:[%s196 + $0x290] sm:$0xff]
      %v287 = vld [vmem:[%s196 + $0x298] sm:$0xff]
      %v288 = vld [vmem:[%s196 + $0x2a0] sm:$0xff]
      %v289 = vld [vmem:[%s196 + $0x2a8] sm:$0xff]
      %v290 = vld [vmem:[%s196 + $0x2b0] sm:$0xff]
      %v291 = vld [vmem:[%s196 + $0x2b8] sm:$0xff]
      %v292 = vld [vmem:[%s196 + $0x2c0] sm:$0xff]
      %v293 = vld [vmem:[%s196 + $0x2c8] sm:$0xff]
      %v294 = vld [vmem:[%s196 + $0x2d0] sm:$0xff]
      %v295 = vld [vmem:[%s196 + $0x2d8] sm:$0xff]
      %v296 = vld [vmem:[%s196 + $0x2e0] sm:$0xff]
      %v297 = vld [vmem:[%s196 + $0x2e8] sm:$0xff]
      %v298 = vld [vmem:[%s196 + $0x2f0] sm:$0xff]
      %v299 = vld [vmem:[%s196 + $0x2f8] sm:$0xff]
      %v300 = vld [vmem:[%s196 + $0x300] sm:$0xff]
      %v301 = vld [vmem:[%s196 + $0x308] sm:$0xff]
      %v302 = vld [vmem:[%s196 + $0x310] sm:$0xff]
      %v303 = vld [vmem:[%s196 + $0x318] sm:$0xff]
      %v304 = vld [vmem:[%s196 + $0x320] sm:$0xff]
      %v305 = vld [vmem:[%s196 + $0x328] sm:$0xff]
      %v306 = vld [vmem:[%s196 + $0x330] sm:$0xff]
      %v307 = vld [vmem:[%s196 + $0x338] sm:$0xff]
      %v308 = vld [vmem:[%s196 + $0x340] sm:$0xff]
      %v309 = vld [vmem:[%s196 + $0x348] sm:$0xff]
      %v310 = vld [vmem:[%s196 + $0x350] sm:$0xff]
      %v311 = vld [vmem:[%s196 + $0x358] sm:$0xff]
      %v312 = vld [vmem:[%s196 + $0x360] sm:$0xff]
      %v313 = vld [vmem:[%s196 + $0x368] sm:$0xff]
      %v314 = vld [vmem:[%s196 + $0x370] sm:$0xff]
      %v315 = vld [vmem:[%s196 + $0x378] sm:$0xff]
      %v316 = vld [vmem:[%s196 + $0x380] sm:$0xff]
      %v317 = vld [vmem:[%s196 + $0x388] sm:$0xff]
      %v318 = vld [vmem:[%s196 + $0x390] sm:$0xff]
      %v319 = vld [vmem:[%s196 + $0x398] sm:$0xff]
      %v320 = vld [vmem:[%s196 + $0x3a0] sm:$0xff]
      %v321 = vld [vmem:[%s196 + $0x3a8] sm:$0xff]
      %v322 = vld [vmem:[%s196 + $0x3b0] sm:$0xff]
      %v323 = vld [vmem:[%s196 + $0x3b8] sm:$0xff]
      %v324 = vld [vmem:[%s196 + $0x3c0] sm:$0xff]
      %v325 = vld [vmem:[%s196 + $0x3c8] sm:$0xff]
      %v326 = vld [vmem:[%s196 + $0x3d0] sm:$0xff]
      %v327 = vld [vmem:[%s196 + $0x3d8] sm:$0xff]
      %v328 = vld [vmem:[%s196 + $0x3e0] sm:$0xff]
      %v329 = vld [vmem:[%s196 + $0x3e8] sm:$0xff]
      %v330 = vld [vmem:[%s196 + $0x3f0] sm:$0xff]
      %v331 = vld [vmem:[%s196 + $0x3f8] sm:$0xff]
      %v332 = vld [vmem:[%s196 + $0x400] sm:$0xff]
      %v333 = vld [vmem:[%s196 + $0x408] sm:$0xff]
      %v334 = vld [vmem:[%s196 + $0x410] sm:$0xff]
      %v335 = vld [vmem:[%s196 + $0x418] sm:$0xff]
      %v336 = vld [vmem:[%s196 + $0x420] sm:$0xff]
      %v337 = vld [vmem:[%s196 + $0x428] sm:$0xff]
      %v338 = vld [vmem:[%s196 + $0x430] sm:$0xff]
      %v339 = vld [vmem:[%s196 + $0x438] sm:$0xff]
      %v340 = vld [vmem:[%s196 + $0x440] sm:$0xff]
      %v341 = vld [vmem:[%s196 + $0x448] sm:$0xff]
      %v342 = vld [vmem:[%s196 + $0x450] sm:$0xff]
      %v343 = vld [vmem:[%s196 + $0x458] sm:$0xff]
      %v344 = vld [vmem:[%s196 + $0x460] sm:$0xff]
      %v345 = vld [vmem:[%s196 + $0x468] sm:$0xff]
      %v346 = vld [vmem:[%s196 + $0x470] sm:$0xff]
      %v347 = vld [vmem:[%s196 + $0x478] sm:$0xff]
      %v348 = vld [vmem:[%s196 + $0x480] sm:$0xff]
      %v349 = vld [vmem:[%s196 + $0x488] sm:$0xff]
      %v350 = vld [vmem:[%s196 + $0x490] sm:$0xff]
      %v351 = vld [vmem:[%s196 + $0x498] sm:$0xff]
      %v352 = vld [vmem:[%s196 + $0x4a0] sm:$0xff]
      %v353 = vld [vmem:[%s196 + $0x4a8] sm:$0xff]
      %v354 = vld [vmem:[%s196 + $0x4b0] sm:$0xff]
      %v355 = vld [vmem:[%s196 + $0x4b8] sm:$0xff]
      %v356 = vld [vmem:[%s196 + $0x4c0] sm:$0xff]
      %v357 = vld [vmem:[%s196 + $0x4c8] sm:$0xff]
      %v358 = vld [vmem:[%s196 + $0x4d0] sm:$0xff]
      %v359 = vld [vmem:[%s196 + $0x4d8] sm:$0xff]
      %v360 = vld [vmem:[%s196 + $0x4e0] sm:$0xff]
      %v361 = vld [vmem:[%s196 + $0x4e8] sm:$0xff]
      %v362 = vld [vmem:[%s196 + $0x4f0] sm:$0xff]
      %v363 = vld [vmem:[%s196 + $0x4f8] sm:$0xff]
      %v364 = vld [vmem:[%s196 + $0x500] sm:$0xff]
      %v365 = vld [vmem:[%s196 + $0x508] sm:$0xff]
      %v366 = vld [vmem:[%s196 + $0x510] sm:$0xff]
      %v367 = vld [vmem:[%s196 + $0x518] sm:$0xff]
      %v368 = vld [vmem:[%s196 + $0x520] sm:$0xff]
      %v369 = vld [vmem:[%s196 + $0x528] sm:$0xff]
      %v370 = vld [vmem:[%s196 + $0x530] sm:$0xff]
      %v371 = vld [vmem:[%s196 + $0x538] sm:$0xff]
      %v372 = vld [vmem:[%s196 + $0x540] sm:$0xff]
      %v373 = vld [vmem:[%s196 + $0x548] sm:$0xff]
      %v374 = vld [vmem:[%s196 + $0x550] sm:$0xff]
      %v375 = vld [vmem:[%s196 + $0x558] sm:$0xff]
      %v376 = vld [vmem:[%s196 + $0x560] sm:$0xff]
      %v377 = vld [vmem:[%s196 + $0x568] sm:$0xff]
      %v378 = vld [vmem:[%s196 + $0x570] sm:$0xff]
      %v379 = vld [vmem:[%s196 + $0x578] sm:$0xff]
      %v380 = vld [vmem:[%s196 + $0x580] sm:$0xff]
      %v381 = vld [vmem:[%s196 + $0x588] sm:$0xff]
      %v382 = vld [vmem:[%s196 + $0x590] sm:$0xff]
      %v383 = vld [vmem:[%s196 + $0x598] sm:$0xff]
      %v384 = vld [vmem:[%s196 + $0x5a0] sm:$0xff]
      %v385 = vld [vmem:[%s196 + $0x5a8] sm:$0xff]
      %v386 = vld [vmem:[%s196 + $0x5b0] sm:$0xff]
      %v387 = vld [vmem:[%s196 + $0x5b8] sm:$0xff]
      %v388 = vld [vmem:[%s196 + $0x5c0] sm:$0xff]
      %v389 = vld [vmem:[%s196 + $0x5c8] sm:$0xff]
      %v390 = vld [vmem:[%s196 + $0x5d0] sm:$0xff]
      %v391 = vld [vmem:[%s196 + $0x5d8] sm:$0xff]
      %v392 = vld [vmem:[%s196 + $0x5e0] sm:$0xff]
      %v393 = vld [vmem:[%s196 + $0x5e8] sm:$0xff]
      %v394 = vld [vmem:[%s196 + $0x5f0] sm:$0xff]
      %v395 = vld [vmem:[%s196 + $0x5f8] sm:$0xff]
      %v396 = vld [vmem:[%s196 + $0x600] sm:$0xff]
      %v397 = vld [vmem:[%s196 + $0x608] sm:$0xff]
      %v398 = vld [vmem:[%s196 + $0x610] sm:$0xff]
      %v399 = vld [vmem:[%s196 + $0x618] sm:$0xff]
      %v400 = vld [vmem:[%s196 + $0x620] sm:$0xff]
      %v401 = vld [vmem:[%s196 + $0x628] sm:$0xff]
      %v402 = vld [vmem:[%s196 + $0x630] sm:$0xff]
      %v403 = vld [vmem:[%s196 + $0x638] sm:$0xff]
      %v404 = vld [vmem:[%s196 + $0x640] sm:$0xff]
      %v405 = vld [vmem:[%s196 + $0x648] sm:$0xff]
      %v406 = vld [vmem:[%s196 + $0x650] sm:$0xff]
      %v407 = vld [vmem:[%s196 + $0x658] sm:$0xff]
      %v408 = vld [vmem:[%s196 + $0x660] sm:$0xff]
      %v409 = vld [vmem:[%s196 + $0x668] sm:$0xff]
      %v410 = vld [vmem:[%s196 + $0x670] sm:$0xff]
      %v411 = vld [vmem:[%s196 + $0x678] sm:$0xff]
      %v412 = vld [vmem:[%s196 + $0x680] sm:$0xff]
      %v413 = vld [vmem:[%s196 + $0x688] sm:$0xff]
      %v414 = vld [vmem:[%s196 + $0x690] sm:$0xff]
      %v415 = vld [vmem:[%s196 + $0x698] sm:$0xff]
      %v416 = vld [vmem:[%s196 + $0x6a0] sm:$0xff]
      %v417 = vld [vmem:[%s196 + $0x6a8] sm:$0xff]
      %v418 = vld [vmem:[%s196 + $0x6b0] sm:$0xff]
      %v419 = vld [vmem:[%s196 + $0x6b8] sm:$0xff]
      %v420 = vld [vmem:[%s196 + $0x6c0] sm:$0xff]
      %v421 = vld [vmem:[%s196 + $0x6c8] sm:$0xff]
      %v422 = vld [vmem:[%s196 + $0x6d0] sm:$0xff]
      %v423 = vld [vmem:[%s196 + $0x6d8] sm:$0xff]
      %v424 = vld [vmem:[%s196 + $0x6e0] sm:$0xff]
      %v425 = vld [vmem:[%s196 + $0x6e8] sm:$0xff]
      %v426 = vld [vmem:[%s196 + $0x6f0] sm:$0xff]
      %v427 = vld [vmem:[%s196 + $0x6f8] sm:$0xff]
      %v428 = vld [vmem:[%s196 + $0x700] sm:$0xff]
      %v429 = vld [vmem:[%s196 + $0x708] sm:$0xff]
      %v430 = vld [vmem:[%s196 + $0x710] sm:$0xff]
      %v431 = vld [vmem:[%s196 + $0x718] sm:$0xff]
      %v432 = vld [vmem:[%s196 + $0x720] sm:$0xff]
      %v433 = vld [vmem:[%s196 + $0x728] sm:$0xff]
      %v434 = vld [vmem:[%s196 + $0x730] sm:$0xff]
      %v435 = vld [vmem:[%s196 + $0x738] sm:$0xff]
      %v436 = vld [vmem:[%s196 + $0x740] sm:$0xff]
      %v437 = vld [vmem:[%s196 + $0x748] sm:$0xff]
      %v438 = vld [vmem:[%s196 + $0x750] sm:$0xff]
      %v439 = vld [vmem:[%s196 + $0x758] sm:$0xff]
      %v440 = vld [vmem:[%s196 + $0x760] sm:$0xff]
      %v441 = vld [vmem:[%s196 + $0x768] sm:$0xff]
      %v442 = vld [vmem:[%s196 + $0x770] sm:$0xff]
      %v443 = vld [vmem:[%s196 + $0x778] sm:$0xff]
      %v444 = vld [vmem:[%s196 + $0x780] sm:$0xff]
      %v445 = vld [vmem:[%s196 + $0x788] sm:$0xff]
      %v446 = vld [vmem:[%s196 + $0x790] sm:$0xff]
      %v447 = vld [vmem:[%s196 + $0x798] sm:$0xff]
      %v448 = vld [vmem:[%s196 + $0x7a0] sm:$0xff]
      %v449 = vld [vmem:[%s196 + $0x7a8] sm:$0xff]
      %v450 = vld [vmem:[%s196 + $0x7b0] sm:$0xff]
      %v451 = vld [vmem:[%s196 + $0x7b8] sm:$0xff]
      %v452 = vld [vmem:[%s196 + $0x7c0] sm:$0xff]
      %v453 = vld [vmem:[%s196 + $0x7c8] sm:$0xff]
      %v454 = vld [vmem:[%s196 + $0x7d0] sm:$0xff]
      %v455 = vld [vmem:[%s196 + $0x7d8] sm:$0xff]
      %v456 = vld [vmem:[%s196 + $0x7e0] sm:$0xff]
      %v457 = vld [vmem:[%s196 + $0x7e8] sm:$0xff]
      %v458 = vld [vmem:[%s196 + $0x7f0] sm:$0xff]
      %v459 = vld [vmem:[%s196 + $0x7f8] sm:$0xff]
      %v460 = vld [vmem:[%s1] sm:$0xff]
      %v461 = vld [vmem:[%s1 + $0x8] sm:$0xff]
      %v462 = vld [vmem:[%s1 + $0x10] sm:$0xff]
      %v463 = vld [vmem:[%s1 + $0x18] sm:$0xff]
      %v464 = vld [vmem:[%s1 + $0x20] sm:$0xff]
      %v465 = vld [vmem:[%s1 + $0x28] sm:$0xff]
      %v466 = vld [vmem:[%s1 + $0x30] sm:$0xff]
      %v467 = vld [vmem:[%s1 + $0x38] sm:$0xff]
      %v468 = vld [vmem:[%s1 + $0x40] sm:$0xff]
      %v469 = vld [vmem:[%s1 + $0x48] sm:$0xff]
      %v470 = vld [vmem:[%s1 + $0x50] sm:$0xff]
      %v471 = vld [vmem:[%s1 + $0x58] sm:$0xff]
      %v472 = vld [vmem:[%s1 + $0x60] sm:$0xff]
      %v473 = vld [vmem:[%s1 + $0x68] sm:$0xff]
      %v474 = vld [vmem:[%s1 + $0x70] sm:$0xff]
      %v475 = vld [vmem:[%s1 + $0x78] sm:$0xff]
      %v476 = vld [vmem:[%s1 + $0x80] sm:$0xff]
      %v477 = vld [vmem:[%s1 + $0x88] sm:$0xff]
      %v478 = vld [vmem:[%s1 + $0x90] sm:$0x7]
      %vm479 = vcmask 154624
      %v481 = vsel %vm479, %v205, 0
      %v484 = vsel %vm479, %v207, 0
      %v487 = vsel %vm479, %v209, 0
      %v490 = vsel %vm479, %v211, 0
      %v493 = vsel %vm479, %v213, 0
      %v496 = vsel %vm479, %v215, 0
      %v499 = vsel %vm479, %v217, 0
      %v502 = vsel %vm479, %v219, 0
      %v505 = vsel %vm479, %v221, 0
      %v508 = vsel %vm479, %v223, 0
      %v511 = vsel %vm479, %v225, 0
      %v514 = vsel %vm479, %v227, 0
      %v517 = vsel %vm479, %v229, 0
      %v520 = vsel %vm479, %v231, 0
      %v523 = vsel %vm479, %v233, 0
      %v526 = vsel %vm479, %v235, 0
      %v529 = vsel %vm479, %v237, 0
      %v532 = vsel %vm479, %v239, 0
      %v535 = vsel %vm479, %v241, 0
      %v538 = vsel %vm479, %v243, 0
      %v541 = vsel %vm479, %v245, 0
      %v544 = vsel %vm479, %v247, 0
      %v547 = vsel %vm479, %v249, 0
      %v550 = vsel %vm479, %v251, 0
      %v553 = vsel %vm479, %v253, 0
      %v556 = vsel %vm479, %v255, 0
      %v559 = vsel %vm479, %v257, 0
      %v562 = vsel %vm479, %v259, 0
      %v565 = vsel %vm479, %v261, 0
      %v568 = vsel %vm479, %v263, 0
      %v571 = vsel %vm479, %v265, 0
      %v574 = vsel %vm479, %v267, 0
      %v577 = vsel %vm479, %v269, 0
      %v580 = vsel %vm479, %v271, 0
      %v583 = vsel %vm479, %v273, 0
      %v586 = vsel %vm479, %v275, 0
      %v589 = vsel %vm479, %v277, 0
      %v592 = vsel %vm479, %v279, 0
      %v595 = vsel %vm479, %v281, 0
      %v598 = vsel %vm479, %v283, 0
      %v601 = vsel %vm479, %v285, 0
      %v604 = vsel %vm479, %v287, 0
      %v607 = vsel %vm479, %v289, 0
      %v610 = vsel %vm479, %v291, 0
      %v613 = vsel %vm479, %v293, 0
      %v616 = vsel %vm479, %v295, 0
      %v619 = vsel %vm479, %v297, 0
      %v622 = vsel %vm479, %v299, 0
      %v625 = vsel %vm479, %v301, 0
      %v628 = vsel %vm479, %v303, 0
      %v631 = vsel %vm479, %v305, 0
      %v634 = vsel %vm479, %v307, 0
      %v637 = vsel %vm479, %v309, 0
      %v640 = vsel %vm479, %v311, 0
      %v643 = vsel %vm479, %v313, 0
      %v646 = vsel %vm479, %v315, 0
      %v649 = vsel %vm479, %v317, 0
      %v652 = vsel %vm479, %v319, 0
      %v655 = vsel %vm479, %v321, 0
      %v658 = vsel %vm479, %v323, 0
      %v661 = vsel %vm479, %v325, 0
      %v664 = vsel %vm479, %v327, 0
      %v667 = vsel %vm479, %v329, 0
      %v670 = vsel %vm479, %v331, 0
      %v673 = vsel %vm479, %v333, 0
      %v676 = vsel %vm479, %v335, 0
      %v679 = vsel %vm479, %v337, 0
      %v682 = vsel %vm479, %v339, 0
      %v685 = vsel %vm479, %v341, 0
      %v688 = vsel %vm479, %v343, 0
      %v691 = vsel %vm479, %v345, 0
      %v694 = vsel %vm479, %v347, 0
      %v697 = vsel %vm479, %v349, 0
      %v700 = vsel %vm479, %v351, 0
      %v703 = vsel %vm479, %v353, 0
      %v706 = vsel %vm479, %v355, 0
      %v709 = vsel %vm479, %v357, 0
      %v712 = vsel %vm479, %v359, 0
      %v715 = vsel %vm479, %v361, 0
      %v718 = vsel %vm479, %v363, 0
      %v721 = vsel %vm479, %v365, 0
      %v724 = vsel %vm479, %v367, 0
      %v727 = vsel %vm479, %v369, 0
      %v730 = vsel %vm479, %v371, 0
      %v733 = vsel %vm479, %v373, 0
      %v736 = vsel %vm479, %v375, 0
      %v739 = vsel %vm479, %v377, 0
      %v742 = vsel %vm479, %v379, 0
      %v745 = vsel %vm479, %v381, 0
      %v748 = vsel %vm479, %v383, 0
      %v751 = vsel %vm479, %v385, 0
      %v754 = vsel %vm479, %v387, 0
      %v757 = vsel %vm479, %v389, 0
      %v760 = vsel %vm479, %v391, 0
      %v763 = vsel %vm479, %v393, 0
      %v766 = vsel %vm479, %v395, 0
      %v769 = vsel %vm479, %v397, 0
      %v772 = vsel %vm479, %v399, 0
      %v775 = vsel %vm479, %v401, 0
      %v778 = vsel %vm479, %v403, 0
      %v781 = vsel %vm479, %v405, 0
      %v784 = vsel %vm479, %v407, 0
      %v787 = vsel %vm479, %v409, 0
      %v790 = vsel %vm479, %v411, 0
      %v793 = vsel %vm479, %v413, 0
      %v796 = vsel %vm479, %v415, 0
      %v799 = vsel %vm479, %v417, 0
      %v802 = vsel %vm479, %v419, 0
      %v805 = vsel %vm479, %v421, 0
      %v808 = vsel %vm479, %v423, 0
      %v811 = vsel %vm479, %v425, 0
      %v814 = vsel %vm479, %v427, 0
      %v817 = vsel %vm479, %v429, 0
      %v820 = vsel %vm479, %v431, 0
      %v823 = vsel %vm479, %v433, 0
      %v826 = vsel %vm479, %v435, 0
      %v829 = vsel %vm479, %v437, 0
      %v832 = vsel %vm479, %v439, 0
      %v835 = vsel %vm479, %v441, 0
      %v838 = vsel %vm479, %v443, 0
      %v841 = vsel %vm479, %v445, 0
      %v844 = vsel %vm479, %v447, 0
      %v847 = vsel %vm479, %v449, 0
      %v850 = vsel %vm479, %v451, 0
      %v853 = vsel %vm479, %v453, 0
      %v856 = vsel %vm479, %v455, 0
      %v859 = vsel %vm479, %v457, 0
      %v862 = vsel %vm479, %v459, 0
      %vm864 = vcmask 1042432
      %v866 = vsel %vm864, %v478, 0
      %868 = vmatprep.subr.mxu0 0.0
      %869 = vmatpush1.msra.mxu0 %v460
      %870 = vmatprep.subr.mxu0 0.0
      %871 = vmatpush1.msra.mxu0 %v461
      %872 = vmatprep.subr.mxu0 0.0
      %873 = vmatpush1.msra.mxu0 %v462
      %874 = vmatprep.subr.mxu0 0.0
      %875 = vmatpush1.msra.mxu0 %v463
      %876 = vmatprep.subr.mxu0 0.0
      %877 = vmatpush1.msra.mxu0 %v464
      %878 = vmatprep.subr.mxu0 0.0
      %879 = vmatpush1.msra.mxu0 %v465
      %880 = vmatprep.subr.mxu0 0.0
      %881 = vmatpush1.msra.mxu0 %v466
      %882 = vmatprep.subr.mxu0 0.0
      %883 = vmatpush1.msra.mxu0 %v467
      %884 = vmatprep.subr.mxu0 0.0
      %885 = vmatpush1.msra.mxu0 %v468
      %886 = vmatprep.subr.mxu0 0.0
      %887 = vmatpush1.msra.mxu0 %v469
      %888 = vmatprep.subr.mxu0 0.0
      %889 = vmatpush1.msra.mxu0 %v470
      %890 = vmatprep.subr.mxu0 0.0
      %891 = vmatpush1.msra.mxu0 %v471
      %892 = vmatprep.subr.mxu0 0.0
      %893 = vmatpush1.msra.mxu0 %v472
      %894 = vmatprep.subr.mxu0 0.0
      %895 = vmatpush1.msra.mxu0 %v473
      %896 = vmatprep.subr.mxu0 0.0
      %897 = vmatpush1.msra.mxu0 %v474
      %898 = vmatprep.subr.mxu0 0.0
      %899 = vmatpush1.msra.mxu0 %v475
      %900 = vmatprep.subr.mxu0 0.0
      %901 = vmatpush1.msra.mxu0 %v476
      %902 = vmatprep.subr.mxu0 0.0
      %903 = vmatpush1.msra.mxu0 %v477
      %904 = vmatprep.subr.mxu0 0.0
      %905 = vmatpush1.msra.mxu0 %v866
      %906 = vmatprep.subr.mxu0 0.0
      %907 = vmatpush1.msra.mxu0 0.0
      %908 = vmatprep.subr.mxu0 0.0
      %909 = vmatpush1.msra.mxu0 0.0
      %910 = vmatprep.subr.mxu0 0.0
      %911 = vmatpush1.msra.mxu0 0.0
      %912 = vmatprep.subr.mxu0 0.0
      %913 = vmatpush1.msra.mxu0 0.0
      %914 = vmatprep.subr.mxu0 0.0
      %915 = vmatpush1.msra.mxu0 0.0
      %916 = vmatprep.subr.mxu0 0.0
      %917 = vmatpush1.msra.mxu0 0.0
      %918 = vmatprep.subr.mxu0 0.0
      %919 = vmatpush1.msra.mxu0 0.0
      %920 = vmatprep.subr.mxu0 0.0
      %921 = vmatpush1.msra.mxu0 0.0
      %922 = vmatprep.subr.mxu0 0.0
      %923 = vmatpush1.msra.mxu0 0.0
      %924 = vmatprep.subr.mxu0 0.0
      %925 = vmatpush1.msra.mxu0 0.0
      %926 = vmatprep.subr.mxu0 0.0
      %927 = vmatpush1.msra.mxu0 0.0
      %928 = vmatprep.subr.mxu0 0.0
      %929 = vmatpush1.msra.mxu0 0.0
      %930 = vmatprep.subr.mxu0 0.0
      %931 = vmatpush1.msra.mxu0 0.0
      %932 = vmatprep.mubr.f32.mxu0 %v481
      %933 = vmatmul.mubr.f32.gmra.mrb[0].mxu0 %v204
      %v934 = vpop.f32.mrb[0].mxu0
      %v935 = vadd.f32 0.0, %v934
      %v936 = vpop.f32.mrb[0].mxu0
      %937 = vmatprep.mubr.f32.mxu0 %v484
      %938 = vmatmul.mubr.f32.gmra.mrb[0].mxu0 %v206
      %v939 = vpop.f32.mrb[0].mxu0
      %v940 = vadd.f32 0.0, %v939
      %v941 = vpop.f32.mrb[0].mxu0
      %942 = vmatprep.mubr.f32.mxu0 %v487
      %943 = vmatmul.mubr.f32.gmra.mrb[0].mxu0 %v208
      %v944 = vpop.f32.mrb[0].mxu0
      %v945 = vadd.f32 0.0, %v944
      %v946 = vpop.f32.mrb[0].mxu0
      %947 = vmatprep.mubr.f32.mxu0 %v490
      %948 = vmatmul.mubr.f32.gmra.mrb[0].mxu0 %v210
      %v949 = vpop.f32.mrb[0].mxu0
      %v950 = vadd.f32 0.0, %v949
      %v951 = vpop.f32.mrb[0].mxu0
      %952 = vmatprep.mubr.f32.mxu0 %v493
      %953 = vmatmul.mubr.f32.gmra.mrb[0].mxu0 %v212
      %v954 = vpop.f32.mrb[0].mxu0
      %v955 = vadd.f32 0.0, %v954
      %v956 = vpop.f32.mrb[0].mxu0
      %957 = vmatprep.mubr.f32.mxu0 %v496
      %958 = vmatmul.mubr.f32.gmra.mrb[0].mxu0 %v214
      %v959 = vpop.f32.mrb[0].mxu0
      %v960 = vadd.f32 0.0, %v959
      %v961 = vpop.f32.mrb[0].mxu0
      %962 = vmatprep.mubr.f32.mxu0 %v499
      %963 = vmatmul.mubr.f32.gmra.mrb[0].mxu0 %v216
      %v964 = vpop.f32.mrb[0].mxu0
      %v965 = vadd.f32 0.0, %v964
      %v966 = vpop.f32.mrb[0].mxu0
      %967 = vmatprep.mubr.f32.mxu0 %v502
      %968 = vmatmul.mubr.f32.gmra.mrb[0].mxu0 %v218
      %v969 = vpop.f32.mrb[0].mxu0
      %v970 = vadd.f32 0.0, %v969
      %v971 = vpop.f32.mrb[0].mxu0
      %972 = vmatprep.mubr.f32.mxu0 %v505
      %973 = vmatmul.mubr.f32.gmra.mrb[0].mxu0 %v220
      %v974 = vpop.f32.mrb[0].mxu0
      %v975 = vadd.f32 0.0, %v974
      %v976 = vpop.f32.mrb[0].mxu0
      %977 = vmatprep.mubr.f32.mxu0 %v508
      %978 = vmatmul.mubr.f32.gmra.mrb[0].mxu0 %v222
      %v979 = vpop.f32.mrb[0].mxu0
      %v980 = vadd.f32 0.0, %v979
      %v981 = vpop.f32.mrb[0].mxu0
      %982 = vmatprep.mubr.f32.mxu0 %v511
      %983 = vmatmul.mubr.f32.gmra.mrb[0].mxu0 %v224
      %v984 = vpop.f32.mrb[0].mxu0
      %v985 = vadd.f32 0.0, %v984
      %v986 = vpop.f32.mrb[0].mxu0
      %987 = vmatprep.mubr.f32.mxu0 %v514
      %988 = vmatmul.mubr.f32.gmra.mrb[0].mxu0 %v226
      %v989 = vpop.f32.mrb[0].mxu0
      %v990 = vadd.f32 0.0, %v989
      %v991 = vpop.f32.mrb[0].mxu0
      %992 = vmatprep.mubr.f32.mxu0 %v517
      %993 = vmatmul.mubr.f32.gmra.mrb[0].mxu0 %v228
      %v994 = vpop.f32.mrb[0].mxu0
      %v995 = vadd.f32 0.0, %v994
      %v996 = vpop.f32.mrb[0].mxu0
      %997 = vmatprep.mubr.f32.mxu0 %v520
      %998 = vmatmul.mubr.f32.gmra.mrb[0].mxu0 %v230
      %v999 = vpop.f32.mrb[0].mxu0
      %v1000 = vadd.f32 0.0, %v999
      %v1001 = vpop.f32.mrb[0].mxu0
      %1002 = vmatprep.mubr.f32.mxu0 %v523
      %1003 = vmatmul.mubr.f32.gmra.mrb[0].mxu0 %v232
      %v1004 = vpop.f32.mrb[0].mxu0
      %v1005 = vadd.f32 0.0, %v1004
      %v1006 = vpop.f32.mrb[0].mxu0
      %1007 = vmatprep.mubr.f32.mxu0 %v526
      %1008 = vmatmul.mubr.f32.gmra.mrb[0].mxu0 %v234
      %v1009 = vpop.f32.mrb[0].mxu0
      %v1010 = vadd.f32 0.0, %v1009
      %v1011 = vpop.f32.mrb[0].mxu0
      %1012 = vmatprep.mubr.f32.mxu0 %v529
      %1013 = vmatmul.mubr.f32.gmra.mrb[0].mxu0 %v236
      %v1014 = vpop.f32.mrb[0].mxu0
      %v1015 = vadd.f32 0.0, %v1014
      %v1016 = vpop.f32.mrb[0].mxu0
      %1017 = vmatprep.mubr.f32.mxu0 %v532
      %1018 = vmatmul.mubr.f32.gmra.mrb[0].mxu0 %v238
      %v1019 = vpop.f32.mrb[0].mxu0
      %v1020 = vadd.f32 0.0, %v1019
      %v1021 = vpop.f32.mrb[0].mxu0
      %1022 = vmatprep.mubr.f32.mxu0 %v535
      %1023 = vmatmul.mubr.f32.gmra.mrb[0].mxu0 %v240
      %v1024 = vpop.f32.mrb[0].mxu0
      %v1025 = vadd.f32 0.0, %v1024
      %v1026 = vpop.f32.mrb[0].mxu0
      %1027 = vmatprep.mubr.f32.mxu0 %v538
      %1028 = vmatmul.mubr.f32.gmra.mrb[0].mxu0 %v242
      %v1029 = vpop.f32.mrb[0].mxu0
      %v1030 = vadd.f32 0.0, %v1029
      %v1031 = vpop.f32.mrb[0].mxu0
      %1032 = vmatprep.mubr.f32.mxu0 %v541
      %1033 = vmatmul.mubr.f32.gmra.mrb[0].mxu0 %v244
      %v1034 = vpop.f32.mrb[0].mxu0
      %v1035 = vadd.f32 0.0, %v1034
      %v1036 = vpop.f32.mrb[0].mxu0
      %1037 = vmatprep.mubr.f32.mxu0 %v544
      %1038 = vmatmul.mubr.f32.gmra.mrb[0].mxu0 %v246
      %v1039 = vpop.f32.mrb[0].mxu0
      %v1040 = vadd.f32 0.0, %v1039
      %v1041 = vpop.f32.mrb[0].mxu0
      %1042 = vmatprep.mubr.f32.mxu0 %v547
      %1043 = vmatmul.mubr.f32.gmra.mrb[0].mxu0 %v248
      %v1044 = vpop.f32.mrb[0].mxu0
      %v1045 = vadd.f32 0.0, %v1044
      %v1046 = vpop.f32.mrb[0].mxu0
      %1047 = vmatprep.mubr.f32.mxu0 %v550
      %1048 = vmatmul.mubr.f32.gmra.mrb[0].mxu0 %v250
      %v1049 = vpop.f32.mrb[0].mxu0
      %v1050 = vadd.f32 0.0, %v1049
      %v1051 = vpop.f32.mrb[0].mxu0
      %1052 = vmatprep.mubr.f32.mxu0 %v553
      %1053 = vmatmul.mubr.f32.gmra.mrb[0].mxu0 %v252
      %v1054 = vpop.f32.mrb[0].mxu0
      %v1055 = vadd.f32 0.0, %v1054
      %v1056 = vpop.f32.mrb[0].mxu0
      %1057 = vmatprep.mubr.f32.mxu0 %v556
      %1058 = vmatmul.mubr.f32.gmra.mrb[0].mxu0 %v254
      %v1059 = vpop.f32.mrb[0].mxu0
      %v1060 = vadd.f32 0.0, %v1059
      %v1061 = vpop.f32.mrb[0].mxu0
      %1062 = vmatprep.mubr.f32.mxu0 %v559
      %1063 = vmatmul.mubr.f32.gmra.mrb[0].mxu0 %v256
      %v1064 = vpop.f32.mrb[0].mxu0
      %v1065 = vadd.f32 0.0, %v1064
      %v1066 = vpop.f32.mrb[0].mxu0
      %1067 = vmatprep.mubr.f32.mxu0 %v562
      %1068 = vmatmul.mubr.f32.gmra.mrb[0].mxu0 %v258
      %v1069 = vpop.f32.mrb[0].mxu0
      %v1070 = vadd.f32 0.0, %v1069
      %v1071 = vpop.f32.mrb[0].mxu0
      %1072 = vmatprep.mubr.f32.mxu0 %v565
      %1073 = vmatmul.mubr.f32.gmra.mrb[0].mxu0 %v260
      %v1074 = vpop.f32.mrb[0].mxu0
      %v1075 = vadd.f32 0.0, %v1074
      %v1076 = vpop.f32.mrb[0].mxu0
      %1077 = vmatprep.mubr.f32.mxu0 %v568
      %1078 = vmatmul.mubr.f32.gmra.mrb[0].mxu0 %v262
      %v1079 = vpop.f32.mrb[0].mxu0
      %v1080 = vadd.f32 0.0, %v1079
      %v1081 = vpop.f32.mrb[0].mxu0
      %1082 = vmatprep.mubr.f32.mxu0 %v571
      %1083 = vmatmul.mubr.f32.gmra.mrb[0].mxu0 %v264
      %v1084 = vpop.f32.mrb[0].mxu0
      %v1085 = vadd.f32 0.0, %v1084
      %v1086 = vpop.f32.mrb[0].mxu0
      %1087 = vmatprep.mubr.f32.mxu0 %v574
      %1088 = vmatmul.mubr.f32.gmra.mrb[0].mxu0 %v266
      %v1089 = vpop.f32.mrb[0].mxu0
      %v1090 = vadd.f32 0.0, %v1089
      %v1091 = vpop.f32.mrb[0].mxu0
      %1092 = vmatprep.mubr.f32.mxu0 %v577
      %1093 = vmatmul.mubr.f32.gmra.mrb[0].mxu0 %v268
      %v1094 = vpop.f32.mrb[0].mxu0
      %v1095 = vadd.f32 0.0, %v1094
      %v1096 = vpop.f32.mrb[0].mxu0
      %1097 = vmatprep.mubr.f32.mxu0 %v580
      %1098 = vmatmul.mubr.f32.gmra.mrb[0].mxu0 %v270
      %v1099 = vpop.f32.mrb[0].mxu0
      %v1100 = vadd.f32 0.0, %v1099
      %v1101 = vpop.f32.mrb[0].mxu0
      %1102 = vmatprep.mubr.f32.mxu0 %v583
      %1103 = vmatmul.mubr.f32.gmra.mrb[0].mxu0 %v272
      %v1104 = vpop.f32.mrb[0].mxu0
      %v1105 = vadd.f32 0.0, %v1104
      %v1106 = vpop.f32.mrb[0].mxu0
      %1107 = vmatprep.mubr.f32.mxu0 %v586
      %1108 = vmatmul.mubr.f32.gmra.mrb[0].mxu0 %v274
      %v1109 = vpop.f32.mrb[0].mxu0
      %v1110 = vadd.f32 0.0, %v1109
      %v1111 = vpop.f32.mrb[0].mxu0
      %1112 = vmatprep.mubr.f32.mxu0 %v589
      %1113 = vmatmul.mubr.f32.gmra.mrb[0].mxu0 %v276
      %v1114 = vpop.f32.mrb[0].mxu0
      %v1115 = vadd.f32 0.0, %v1114
      %v1116 = vpop.f32.mrb[0].mxu0
      %1117 = vmatprep.mubr.f32.mxu0 %v592
      %1118 = vmatmul.mubr.f32.gmra.mrb[0].mxu0 %v278
      %v1119 = vpop.f32.mrb[0].mxu0
      %v1120 = vadd.f32 0.0, %v1119
      %v1121 = vpop.f32.mrb[0].mxu0
      %1122 = vmatprep.mubr.f32.mxu0 %v595
      %1123 = vmatmul.mubr.f32.gmra.mrb[0].mxu0 %v280
      %v1124 = vpop.f32.mrb[0].mxu0
      %v1125 = vadd.f32 0.0, %v1124
      %v1126 = vpop.f32.mrb[0].mxu0
      %1127 = vmatprep.mubr.f32.mxu0 %v598
      %1128 = vmatmul.mubr.f32.gmra.mrb[0].mxu0 %v282
      %v1129 = vpop.f32.mrb[0].mxu0
      %v1130 = vadd.f32 0.0, %v1129
      %v1131 = vpop.f32.mrb[0].mxu0
      %1132 = vmatprep.mubr.f32.mxu0 %v601
      %1133 = vmatmul.mubr.f32.gmra.mrb[0].mxu0 %v284
      %v1134 = vpop.f32.mrb[0].mxu0
      %v1135 = vadd.f32 0.0, %v1134
      %v1136 = vpop.f32.mrb[0].mxu0
      %1137 = vmatprep.mubr.f32.mxu0 %v604
      %1138 = vmatmul.mubr.f32.gmra.mrb[0].mxu0 %v286
      %v1139 = vpop.f32.mrb[0].mxu0
      %v1140 = vadd.f32 0.0, %v1139
      %v1141 = vpop.f32.mrb[0].mxu0
      %1142 = vmatprep.mubr.f32.mxu0 %v607
      %1143 = vmatmul.mubr.f32.gmra.mrb[0].mxu0 %v288
      %v1144 = vpop.f32.mrb[0].mxu0
      %v1145 = vadd.f32 0.0, %v1144
      %v1146 = vpop.f32.mrb[0].mxu0
      %1147 = vmatprep.mubr.f32.mxu0 %v610
      %1148 = vmatmul.mubr.f32.gmra.mrb[0].mxu0 %v290
      %v1149 = vpop.f32.mrb[0].mxu0
      %v1150 = vadd.f32 0.0, %v1149
      %v1151 = vpop.f32.mrb[0].mxu0
      %1152 = vmatprep.mubr.f32.mxu0 %v613
      %1153 = vmatmul.mubr.f32.gmra.mrb[0].mxu0 %v292
      %v1154 = vpop.f32.mrb[0].mxu0
      %v1155 = vadd.f32 0.0, %v1154
      %v1156 = vpop.f32.mrb[0].mxu0
      %1157 = vmatprep.mubr.f32.mxu0 %v616
      %1158 = vmatmul.mubr.f32.gmra.mrb[0].mxu0 %v294
      %v1159 = vpop.f32.mrb[0].mxu0
      %v1160 = vadd.f32 0.0, %v1159
      %v1161 = vpop.f32.mrb[0].mxu0
      %1162 = vmatprep.mubr.f32.mxu0 %v619
      %1163 = vmatmul.mubr.f32.gmra.mrb[0].mxu0 %v296
      %v1164 = vpop.f32.mrb[0].mxu0
      %v1165 = vadd.f32 0.0, %v1164
      %v1166 = vpop.f32.mrb[0].mxu0
      %1167 = vmatprep.mubr.f32.mxu0 %v622
      %1168 = vmatmul.mubr.f32.gmra.mrb[0].mxu0 %v298
      %v1169 = vpop.f32.mrb[0].mxu0
      %v1170 = vadd.f32 0.0, %v1169
      %v1171 = vpop.f32.mrb[0].mxu0
      %1172 = vmatprep.mubr.f32.mxu0 %v625
      %1173 = vmatmul.mubr.f32.gmra.mrb[0].mxu0 %v300
      %v1174 = vpop.f32.mrb[0].mxu0
      %v1175 = vadd.f32 0.0, %v1174
      %v1176 = vpop.f32.mrb[0].mxu0
      %1177 = vmatprep.mubr.f32.mxu0 %v628
      %1178 = vmatmul.mubr.f32.gmra.mrb[0].mxu0 %v302
      %v1179 = vpop.f32.mrb[0].mxu0
      %v1180 = vadd.f32 0.0, %v1179
      %v1181 = vpop.f32.mrb[0].mxu0
      %1182 = vmatprep.mubr.f32.mxu0 %v631
      %1183 = vmatmul.mubr.f32.gmra.mrb[0].mxu0 %v304
      %v1184 = vpop.f32.mrb[0].mxu0
      %v1185 = vadd.f32 0.0, %v1184
      %v1186 = vpop.f32.mrb[0].mxu0
      %1187 = vmatprep.mubr.f32.mxu0 %v634
      %1188 = vmatmul.mubr.f32.gmra.mrb[0].mxu0 %v306
      %v1189 = vpop.f32.mrb[0].mxu0
      %v1190 = vadd.f32 0.0, %v1189
      %v1191 = vpop.f32.mrb[0].mxu0
      %1192 = vmatprep.mubr.f32.mxu0 %v637
      %1193 = vmatmul.mubr.f32.gmra.mrb[0].mxu0 %v308
      %v1194 = vpop.f32.mrb[0].mxu0
      %v1195 = vadd.f32 0.0, %v1194
      %v1196 = vpop.f32.mrb[0].mxu0
      %1197 = vmatprep.mubr.f32.mxu0 %v640
      %1198 = vmatmul.mubr.f32.gmra.mrb[0].mxu0 %v310
      %v1199 = vpop.f32.mrb[0].mxu0
      %v1200 = vadd.f32 0.0, %v1199
      %v1201 = vpop.f32.mrb[0].mxu0
      %1202 = vmatprep.mubr.f32.mxu0 %v643
      %1203 = vmatmul.mubr.f32.gmra.mrb[0].mxu0 %v312
      %v1204 = vpop.f32.mrb[0].mxu0
      %v1205 = vadd.f32 0.0, %v1204
      %v1206 = vpop.f32.mrb[0].mxu0
      %1207 = vmatprep.mubr.f32.mxu0 %v646
      %1208 = vmatmul.mubr.f32.gmra.mrb[0].mxu0 %v314
      %v1209 = vpop.f32.mrb[0].mxu0
      %v1210 = vadd.f32 0.0, %v1209
      %v1211 = vpop.f32.mrb[0].mxu0
      %1212 = vmatprep.mubr.f32.mxu0 %v649
      %1213 = vmatmul.mubr.f32.gmra.mrb[0].mxu0 %v316
      %v1214 = vpop.f32.mrb[0].mxu0
      %v1215 = vadd.f32 0.0, %v1214
      %v1216 = vpop.f32.mrb[0].mxu0
      %1217 = vmatprep.mubr.f32.mxu0 %v652
      %1218 = vmatmul.mubr.f32.gmra.mrb[0].mxu0 %v318
      %v1219 = vpop.f32.mrb[0].mxu0
      %v1220 = vadd.f32 0.0, %v1219
      %v1221 = vpop.f32.mrb[0].mxu0
      %1222 = vmatprep.mubr.f32.mxu0 %v655
      %1223 = vmatmul.mubr.f32.gmra.mrb[0].mxu0 %v320
      %v1224 = vpop.f32.mrb[0].mxu0
      %v1225 = vadd.f32 0.0, %v1224
      %v1226 = vpop.f32.mrb[0].mxu0
      %1227 = vmatprep.mubr.f32.mxu0 %v658
      %1228 = vmatmul.mubr.f32.gmra.mrb[0].mxu0 %v322
      %v1229 = vpop.f32.mrb[0].mxu0
      %v1230 = vadd.f32 0.0, %v1229
      %v1231 = vpop.f32.mrb[0].mxu0
      %1232 = vmatprep.mubr.f32.mxu0 %v661
      %1233 = vmatmul.mubr.f32.gmra.mrb[0].mxu0 %v324
      %v1234 = vpop.f32.mrb[0].mxu0
      %v1235 = vadd.f32 0.0, %v1234
      %v1236 = vpop.f32.mrb[0].mxu0
      %1237 = vmatprep.mubr.f32.mxu0 %v664
      %1238 = vmatmul.mubr.f32.gmra.mrb[0].mxu0 %v326
      %v1239 = vpop.f32.mrb[0].mxu0
      %v1240 = vadd.f32 0.0, %v1239
      %v1241 = vpop.f32.mrb[0].mxu0
      %1242 = vmatprep.mubr.f32.mxu0 %v667
      %1243 = vmatmul.mubr.f32.gmra.mrb[0].mxu0 %v328
      %v1244 = vpop.f32.mrb[0].mxu0
      %v1245 = vadd.f32 0.0, %v1244
      %v1246 = vpop.f32.mrb[0].mxu0
      %1247 = vmatprep.mubr.f32.mxu0 %v670
      %1248 = vmatmul.mubr.f32.gmra.mrb[0].mxu0 %v330
      %v1249 = vpop.f32.mrb[0].mxu0
      %v1250 = vadd.f32 0.0, %v1249
      %v1251 = vpop.f32.mrb[0].mxu0
      %1252 = vmatprep.mubr.f32.mxu0 %v673
      %1253 = vmatmul.mubr.f32.gmra.mrb[0].mxu0 %v332
      %v1254 = vpop.f32.mrb[0].mxu0
      %v1255 = vadd.f32 0.0, %v1254
      %v1256 = vpop.f32.mrb[0].mxu0
      %1257 = vmatprep.mubr.f32.mxu0 %v676
      %1258 = vmatmul.mubr.f32.gmra.mrb[0].mxu0 %v334
      %v1259 = vpop.f32.mrb[0].mxu0
      %v1260 = vadd.f32 0.0, %v1259
      %v1261 = vpop.f32.mrb[0].mxu0
      %1262 = vmatprep.mubr.f32.mxu0 %v679
      %1263 = vmatmul.mubr.f32.gmra.mrb[0].mxu0 %v336
      %v1264 = vpop.f32.mrb[0].mxu0
      %v1265 = vadd.f32 0.0, %v1264
      %v1266 = vpop.f32.mrb[0].mxu0
      %1267 = vmatprep.mubr.f32.mxu0 %v682
      %1268 = vmatmul.mubr.f32.gmra.mrb[0].mxu0 %v338
      %v1269 = vpop.f32.mrb[0].mxu0
      %v1270 = vadd.f32 0.0, %v1269
      %v1271 = vpop.f32.mrb[0].mxu0
      %1272 = vmatprep.mubr.f32.mxu0 %v685
      %1273 = vmatmul.mubr.f32.gmra.mrb[0].mxu0 %v340
      %v1274 = vpop.f32.mrb[0].mxu0
      %v1275 = vadd.f32 0.0, %v1274
      %v1276 = vpop.f32.mrb[0].mxu0
      %1277 = vmatprep.mubr.f32.mxu0 %v688
      %1278 = vmatmul.mubr.f32.gmra.mrb[0].mxu0 %v342
      %v1279 = vpop.f32.mrb[0].mxu0
      %v1280 = vadd.f32 0.0, %v1279
      %v1281 = vpop.f32.mrb[0].mxu0
      %1282 = vmatprep.mubr.f32.mxu0 %v691
      %1283 = vmatmul.mubr.f32.gmra.mrb[0].mxu0 %v344
      %v1284 = vpop.f32.mrb[0].mxu0
      %v1285 = vadd.f32 0.0, %v1284
      %v1286 = vpop.f32.mrb[0].mxu0
      %1287 = vmatprep.mubr.f32.mxu0 %v694
      %1288 = vmatmul.mubr.f32.gmra.mrb[0].mxu0 %v346
      %v1289 = vpop.f32.mrb[0].mxu0
      %v1290 = vadd.f32 0.0, %v1289
      %v1291 = vpop.f32.mrb[0].mxu0
      %1292 = vmatprep.mubr.f32.mxu0 %v697
      %1293 = vmatmul.mubr.f32.gmra.mrb[0].mxu0 %v348
      %v1294 = vpop.f32.mrb[0].mxu0
      %v1295 = vadd.f32 0.0, %v1294
      %v1296 = vpop.f32.mrb[0].mxu0
      %1297 = vmatprep.mubr.f32.mxu0 %v700
      %1298 = vmatmul.mubr.f32.gmra.mrb[0].mxu0 %v350
      %v1299 = vpop.f32.mrb[0].mxu0
      %v1300 = vadd.f32 0.0, %v1299
      %v1301 = vpop.f32.mrb[0].mxu0
      %1302 = vmatprep.mubr.f32.mxu0 %v703
      %1303 = vmatmul.mubr.f32.gmra.mrb[0].mxu0 %v352
      %v1304 = vpop.f32.mrb[0].mxu0
      %v1305 = vadd.f32 0.0, %v1304
      %v1306 = vpop.f32.mrb[0].mxu0
      %1307 = vmatprep.mubr.f32.mxu0 %v706
      %1308 = vmatmul.mubr.f32.gmra.mrb[0].mxu0 %v354
      %v1309 = vpop.f32.mrb[0].mxu0
      %v1310 = vadd.f32 0.0, %v1309
      %v1311 = vpop.f32.mrb[0].mxu0
      %1312 = vmatprep.mubr.f32.mxu0 %v709
      %1313 = vmatmul.mubr.f32.gmra.mrb[0].mxu0 %v356
      %v1314 = vpop.f32.mrb[0].mxu0
      %v1315 = vadd.f32 0.0, %v1314
      %v1316 = vpop.f32.mrb[0].mxu0
      %1317 = vmatprep.mubr.f32.mxu0 %v712
      %1318 = vmatmul.mubr.f32.gmra.mrb[0].mxu0 %v358
      %v1319 = vpop.f32.mrb[0].mxu0
      %v1320 = vadd.f32 0.0, %v1319
      %v1321 = vpop.f32.mrb[0].mxu0
      %1322 = vmatprep.mubr.f32.mxu0 %v715
      %1323 = vmatmul.mubr.f32.gmra.mrb[0].mxu0 %v360
      %v1324 = vpop.f32.mrb[0].mxu0
      %v1325 = vadd.f32 0.0, %v1324
      %v1326 = vpop.f32.mrb[0].mxu0
      %1327 = vmatprep.mubr.f32.mxu0 %v718
      %1328 = vmatmul.mubr.f32.gmra.mrb[0].mxu0 %v362
      %v1329 = vpop.f32.mrb[0].mxu0
      %v1330 = vadd.f32 0.0, %v1329
      %v1331 = vpop.f32.mrb[0].mxu0
      %1332 = vmatprep.mubr.f32.mxu0 %v721
      %1333 = vmatmul.mubr.f32.gmra.mrb[0].mxu0 %v364
      %v1334 = vpop.f32.mrb[0].mxu0
      %v1335 = vadd.f32 0.0, %v1334
      %v1336 = vpop.f32.mrb[0].mxu0
      %1337 = vmatprep.mubr.f32.mxu0 %v724
      %1338 = vmatmul.mubr.f32.gmra.mrb[0].mxu0 %v366
      %v1339 = vpop.f32.mrb[0].mxu0
      %v1340 = vadd.f32 0.0, %v1339
      %v1341 = vpop.f32.mrb[0].mxu0
      %1342 = vmatprep.mubr.f32.mxu0 %v727
      %1343 = vmatmul.mubr.f32.gmra.mrb[0].mxu0 %v368
      %v1344 = vpop.f32.mrb[0].mxu0
      %v1345 = vadd.f32 0.0, %v1344
      %v1346 = vpop.f32.mrb[0].mxu0
      %1347 = vmatprep.mubr.f32.mxu0 %v730
      %1348 = vmatmul.mubr.f32.gmra.mrb[0].mxu0 %v370
      %v1349 = vpop.f32.mrb[0].mxu0
      %v1350 = vadd.f32 0.0, %v1349
      %v1351 = vpop.f32.mrb[0].mxu0
      %1352 = vmatprep.mubr.f32.mxu0 %v733
      %1353 = vmatmul.mubr.f32.gmra.mrb[0].mxu0 %v372
      %v1354 = vpop.f32.mrb[0].mxu0
      %v1355 = vadd.f32 0.0, %v1354
      %v1356 = vpop.f32.mrb[0].mxu0
      %1357 = vmatprep.mubr.f32.mxu0 %v736
      %1358 = vmatmul.mubr.f32.gmra.mrb[0].mxu0 %v374
      %v1359 = vpop.f32.mrb[0].mxu0
      %v1360 = vadd.f32 0.0, %v1359
      %v1361 = vpop.f32.mrb[0].mxu0
      %1362 = vmatprep.mubr.f32.mxu0 %v739
      %1363 = vmatmul.mubr.f32.gmra.mrb[0].mxu0 %v376
      %v1364 = vpop.f32.mrb[0].mxu0
      %v1365 = vadd.f32 0.0, %v1364
      %v1366 = vpop.f32.mrb[0].mxu0
      %1367 = vmatprep.mubr.f32.mxu0 %v742
      %1368 = vmatmul.mubr.f32.gmra.mrb[0].mxu0 %v378
      %v1369 = vpop.f32.mrb[0].mxu0
      %v1370 = vadd.f32 0.0, %v1369
      %v1371 = vpop.f32.mrb[0].mxu0
      %1372 = vmatprep.mubr.f32.mxu0 %v745
      %1373 = vmatmul.mubr.f32.gmra.mrb[0].mxu0 %v380
      %v1374 = vpop.f32.mrb[0].mxu0
      %v1375 = vadd.f32 0.0, %v1374
      %v1376 = vpop.f32.mrb[0].mxu0
      %1377 = vmatprep.mubr.f32.mxu0 %v748
      %1378 = vmatmul.mubr.f32.gmra.mrb[0].mxu0 %v382
      %v1379 = vpop.f32.mrb[0].mxu0
      %v1380 = vadd.f32 0.0, %v1379
      %v1381 = vpop.f32.mrb[0].mxu0
      %1382 = vmatprep.mubr.f32.mxu0 %v751
      %1383 = vmatmul.mubr.f32.gmra.mrb[0].mxu0 %v384
      %v1384 = vpop.f32.mrb[0].mxu0
      %v1385 = vadd.f32 0.0, %v1384
      %v1386 = vpop.f32.mrb[0].mxu0
      %1387 = vmatprep.mubr.f32.mxu0 %v754
      %1388 = vmatmul.mubr.f32.gmra.mrb[0].mxu0 %v386
      %v1389 = vpop.f32.mrb[0].mxu0
      %v1390 = vadd.f32 0.0, %v1389
      %v1391 = vpop.f32.mrb[0].mxu0
      %1392 = vmatprep.mubr.f32.mxu0 %v757
      %1393 = vmatmul.mubr.f32.gmra.mrb[0].mxu0 %v388
      %v1394 = vpop.f32.mrb[0].mxu0
      %v1395 = vadd.f32 0.0, %v1394
      %v1396 = vpop.f32.mrb[0].mxu0
      %1397 = vmatprep.mubr.f32.mxu0 %v760
      %1398 = vmatmul.mubr.f32.gmra.mrb[0].mxu0 %v390
      %v1399 = vpop.f32.mrb[0].mxu0
      %v1400 = vadd.f32 0.0, %v1399
      %v1401 = vpop.f32.mrb[0].mxu0
      %1402 = vmatprep.mubr.f32.mxu0 %v763
      %1403 = vmatmul.mubr.f32.gmra.mrb[0].mxu0 %v392
      %v1404 = vpop.f32.mrb[0].mxu0
      %v1405 = vadd.f32 0.0, %v1404
      %v1406 = vpop.f32.mrb[0].mxu0
      %1407 = vmatprep.mubr.f32.mxu0 %v766
      %1408 = vmatmul.mubr.f32.gmra.mrb[0].mxu0 %v394
      %v1409 = vpop.f32.mrb[0].mxu0
      %v1410 = vadd.f32 0.0, %v1409
      %v1411 = vpop.f32.mrb[0].mxu0
      %1412 = vmatprep.mubr.f32.mxu0 %v769
      %1413 = vmatmul.mubr.f32.gmra.mrb[0].mxu0 %v396
      %v1414 = vpop.f32.mrb[0].mxu0
      %v1415 = vadd.f32 0.0, %v1414
      %v1416 = vpop.f32.mrb[0].mxu0
      %1417 = vmatprep.mubr.f32.mxu0 %v772
      %1418 = vmatmul.mubr.f32.gmra.mrb[0].mxu0 %v398
      %v1419 = vpop.f32.mrb[0].mxu0
      %v1420 = vadd.f32 0.0, %v1419
      %v1421 = vpop.f32.mrb[0].mxu0
      %1422 = vmatprep.mubr.f32.mxu0 %v775
      %1423 = vmatmul.mubr.f32.gmra.mrb[0].mxu0 %v400
      %v1424 = vpop.f32.mrb[0].mxu0
      %v1425 = vadd.f32 0.0, %v1424
      %v1426 = vpop.f32.mrb[0].mxu0
      %1427 = vmatprep.mubr.f32.mxu0 %v778
      %1428 = vmatmul.mubr.f32.gmra.mrb[0].mxu0 %v402
      %v1429 = vpop.f32.mrb[0].mxu0
      %v1430 = vadd.f32 0.0, %v1429
      %v1431 = vpop.f32.mrb[0].mxu0
      %1432 = vmatprep.mubr.f32.mxu0 %v781
      %1433 = vmatmul.mubr.f32.gmra.mrb[0].mxu0 %v404
      %v1434 = vpop.f32.mrb[0].mxu0
      %v1435 = vadd.f32 0.0, %v1434
      %v1436 = vpop.f32.mrb[0].mxu0
      %1437 = vmatprep.mubr.f32.mxu0 %v784
      %1438 = vmatmul.mubr.f32.gmra.mrb[0].mxu0 %v406
      %v1439 = vpop.f32.mrb[0].mxu0
      %v1440 = vadd.f32 0.0, %v1439
      %v1441 = vpop.f32.mrb[0].mxu0
      %1442 = vmatprep.mubr.f32.mxu0 %v787
      %1443 = vmatmul.mubr.f32.gmra.mrb[0].mxu0 %v408
      %v1444 = vpop.f32.mrb[0].mxu0
      %v1445 = vadd.f32 0.0, %v1444
      %v1446 = vpop.f32.mrb[0].mxu0
      %1447 = vmatprep.mubr.f32.mxu0 %v790
      %1448 = vmatmul.mubr.f32.gmra.mrb[0].mxu0 %v410
      %v1449 = vpop.f32.mrb[0].mxu0
      %v1450 = vadd.f32 0.0, %v1449
      %v1451 = vpop.f32.mrb[0].mxu0
      %1452 = vmatprep.mubr.f32.mxu0 %v793
      %1453 = vmatmul.mubr.f32.gmra.mrb[0].mxu0 %v412
      %v1454 = vpop.f32.mrb[0].mxu0
      %v1455 = vadd.f32 0.0, %v1454
      %v1456 = vpop.f32.mrb[0].mxu0
      %1457 = vmatprep.mubr.f32.mxu0 %v796
      %1458 = vmatmul.mubr.f32.gmra.mrb[0].mxu0 %v414
      %v1459 = vpop.f32.mrb[0].mxu0
      %v1460 = vadd.f32 0.0, %v1459
      %v1461 = vpop.f32.mrb[0].mxu0
      %1462 = vmatprep.mubr.f32.mxu0 %v799
      %1463 = vmatmul.mubr.f32.gmra.mrb[0].mxu0 %v416
      %v1464 = vpop.f32.mrb[0].mxu0
      %v1465 = vadd.f32 0.0, %v1464
      %v1466 = vpop.f32.mrb[0].mxu0
      %1467 = vmatprep.mubr.f32.mxu0 %v802
      %1468 = vmatmul.mubr.f32.gmra.mrb[0].mxu0 %v418
      %v1469 = vpop.f32.mrb[0].mxu0
      %v1470 = vadd.f32 0.0, %v1469
      %v1471 = vpop.f32.mrb[0].mxu0
      %1472 = vmatprep.mubr.f32.mxu0 %v805
      %1473 = vmatmul.mubr.f32.gmra.mrb[0].mxu0 %v420
      %v1474 = vpop.f32.mrb[0].mxu0
      %v1475 = vadd.f32 0.0, %v1474
      %v1476 = vpop.f32.mrb[0].mxu0
      %1477 = vmatprep.mubr.f32.mxu0 %v808
      %1478 = vmatmul.mubr.f32.gmra.mrb[0].mxu0 %v422
      %v1479 = vpop.f32.mrb[0].mxu0
      %v1480 = vadd.f32 0.0, %v1479
      %v1481 = vpop.f32.mrb[0].mxu0
      %1482 = vmatprep.mubr.f32.mxu0 %v811
      %1483 = vmatmul.mubr.f32.gmra.mrb[0].mxu0 %v424
      %v1484 = vpop.f32.mrb[0].mxu0
      %v1485 = vadd.f32 0.0, %v1484
      %v1486 = vpop.f32.mrb[0].mxu0
      %1487 = vmatprep.mubr.f32.mxu0 %v814
      %1488 = vmatmul.mubr.f32.gmra.mrb[0].mxu0 %v426
      %v1489 = vpop.f32.mrb[0].mxu0
      %v1490 = vadd.f32 0.0, %v1489
      %v1491 = vpop.f32.mrb[0].mxu0
      %1492 = vmatprep.mubr.f32.mxu0 %v817
      %1493 = vmatmul.mubr.f32.gmra.mrb[0].mxu0 %v428
      %v1494 = vpop.f32.mrb[0].mxu0
      %v1495 = vadd.f32 0.0, %v1494
      %v1496 = vpop.f32.mrb[0].mxu0
      %1497 = vmatprep.mubr.f32.mxu0 %v820
      %1498 = vmatmul.mubr.f32.gmra.mrb[0].mxu0 %v430
      %v1499 = vpop.f32.mrb[0].mxu0
      %v1500 = vadd.f32 0.0, %v1499
      %v1501 = vpop.f32.mrb[0].mxu0
      %1502 = vmatprep.mubr.f32.mxu0 %v823
      %1503 = vmatmul.mubr.f32.gmra.mrb[0].mxu0 %v432
      %v1504 = vpop.f32.mrb[0].mxu0
      %v1505 = vadd.f32 0.0, %v1504
      %v1506 = vpop.f32.mrb[0].mxu0
      %1507 = vmatprep.mubr.f32.mxu0 %v826
      %1508 = vmatmul.mubr.f32.gmra.mrb[0].mxu0 %v434
      %v1509 = vpop.f32.mrb[0].mxu0
      %v1510 = vadd.f32 0.0, %v1509
      %v1511 = vpop.f32.mrb[0].mxu0
      %1512 = vmatprep.mubr.f32.mxu0 %v829
      %1513 = vmatmul.mubr.f32.gmra.mrb[0].mxu0 %v436
      %v1514 = vpop.f32.mrb[0].mxu0
      %v1515 = vadd.f32 0.0, %v1514
      %v1516 = vpop.f32.mrb[0].mxu0
      %1517 = vmatprep.mubr.f32.mxu0 %v832
      %1518 = vmatmul.mubr.f32.gmra.mrb[0].mxu0 %v438
      %v1519 = vpop.f32.mrb[0].mxu0
      %v1520 = vadd.f32 0.0, %v1519
      %v1521 = vpop.f32.mrb[0].mxu0
      %1522 = vmatprep.mubr.f32.mxu0 %v835
      %1523 = vmatmul.mubr.f32.gmra.mrb[0].mxu0 %v440
      %v1524 = vpop.f32.mrb[0].mxu0
      %v1525 = vadd.f32 0.0, %v1524
      %v1526 = vpop.f32.mrb[0].mxu0
      %1527 = vmatprep.mubr.f32.mxu0 %v838
      %1528 = vmatmul.mubr.f32.gmra.mrb[0].mxu0 %v442
      %v1529 = vpop.f32.mrb[0].mxu0
      %v1530 = vadd.f32 0.0, %v1529
      %v1531 = vpop.f32.mrb[0].mxu0
      %1532 = vmatprep.mubr.f32.mxu0 %v841
      %1533 = vmatmul.mubr.f32.gmra.mrb[0].mxu0 %v444
      %v1534 = vpop.f32.mrb[0].mxu0
      %v1535 = vadd.f32 0.0, %v1534
      %v1536 = vpop.f32.mrb[0].mxu0
      %1537 = vmatprep.mubr.f32.mxu0 %v844
      %1538 = vmatmul.mubr.f32.gmra.mrb[0].mxu0 %v446
      %v1539 = vpop.f32.mrb[0].mxu0
      %v1540 = vadd.f32 0.0, %v1539
      %v1541 = vpop.f32.mrb[0].mxu0
      %1542 = vmatprep.mubr.f32.mxu0 %v847
      %1543 = vmatmul.mubr.f32.gmra.mrb[0].mxu0 %v448
      %v1544 = vpop.f32.mrb[0].mxu0
      %v1545 = vadd.f32 0.0, %v1544
      %v1546 = vpop.f32.mrb[0].mxu0
      %1547 = vmatprep.mubr.f32.mxu0 %v850
      %1548 = vmatmul.mubr.f32.gmra.mrb[0].mxu0 %v450
      %v1549 = vpop.f32.mrb[0].mxu0
      %v1550 = vadd.f32 0.0, %v1549
      %v1551 = vpop.f32.mrb[0].mxu0
      %1552 = vmatprep.mubr.f32.mxu0 %v853
      %1553 = vmatmul.mubr.f32.gmra.mrb[0].mxu0 %v452
      %v1554 = vpop.f32.mrb[0].mxu0
      %v1555 = vadd.f32 0.0, %v1554
      %v1556 = vpop.f32.mrb[0].mxu0
      %1557 = vmatprep.mubr.f32.mxu0 %v856
      %1558 = vmatmul.mubr.f32.gmra.mrb[0].mxu0 %v454
      %v1559 = vpop.f32.mrb[0].mxu0
      %v1560 = vadd.f32 0.0, %v1559
      %v1561 = vpop.f32.mrb[0].mxu0
      %1562 = vmatprep.mubr.f32.mxu0 %v859
      %1563 = vmatmul.mubr.f32.gmra.mrb[0].mxu0 %v456
      %v1564 = vpop.f32.mrb[0].mxu0
      %v1565 = vadd.f32 0.0, %v1564
      %v1566 = vpop.f32.mrb[0].mxu0
      %1567 = vmatprep.mubr.f32.mxu0 %v862
      %1568 = vmatmul.mubr.f32.gmra.mrb[0].mxu0 %v458
      %v1569 = vpop.f32.mrb[0].mxu0
      %v1570 = vadd.f32 0.0, %v1569
      %v1571 = vpop.f32.mrb[0].mxu0
      %1572 = vdwg.mxu0
      %v1573 = vld [vmem:[%s2] sm:$0x1]
      %v1575 = vlaneseq
      %v1576 = vshrl.u32 %v1575, 7
      %v1577 = vsub.s32 0, %v1576
      %v1578 = vrot.slane %v1573, %v1577
      %v1580 = vmul.f32 %v935, %v1578
      %v1581 = vmul.f32 %v940, %v1578
      %v1582 = vmul.f32 %v945, %v1578
      %v1583 = vmul.f32 %v950, %v1578
      %v1584 = vmul.f32 %v955, %v1578
      %v1585 = vmul.f32 %v960, %v1578
      %v1586 = vmul.f32 %v965, %v1578
      %v1587 = vmul.f32 %v970, %v1578
      %v1588 = vmul.f32 %v975, %v1578
      %v1589 = vmul.f32 %v980, %v1578
      %v1590 = vmul.f32 %v985, %v1578
      %v1591 = vmul.f32 %v990, %v1578
      %v1592 = vmul.f32 %v995, %v1578
      %v1593 = vmul.f32 %v1000, %v1578
      %v1594 = vmul.f32 %v1005, %v1578
      %v1595 = vmul.f32 %v1010, %v1578
      %v1596 = vmul.f32 %v1015, %v1578
      %v1597 = vmul.f32 %v1020, %v1578
      %v1598 = vmul.f32 %v1025, %v1578
      %v1599 = vmul.f32 %v1030, %v1578
      %v1600 = vmul.f32 %v1035, %v1578
      %v1601 = vmul.f32 %v1040, %v1578
      %v1602 = vmul.f32 %v1045, %v1578
      %v1603 = vmul.f32 %v1050, %v1578
      %v1604 = vmul.f32 %v1055, %v1578
      %v1605 = vmul.f32 %v1060, %v1578
      %v1606 = vmul.f32 %v1065, %v1578
      %v1607 = vmul.f32 %v1070, %v1578
      %v1608 = vmul.f32 %v1075, %v1578
      %v1609 = vmul.f32 %v1080, %v1578
      %v1610 = vmul.f32 %v1085, %v1578
      %v1611 = vmul.f32 %v1090, %v1578
      %v1612 = vmul.f32 %v1095, %v1578
      %v1613 = vmul.f32 %v1100, %v1578
      %v1614 = vmul.f32 %v1105, %v1578
      %v1615 = vmul.f32 %v1110, %v1578
      %v1616 = vmul.f32 %v1115, %v1578
      %v1617 = vmul.f32 %v1120, %v1578
      %v1618 = vmul.f32 %v1125, %v1578
      %v1619 = vmul.f32 %v1130, %v1578
      %v1620 = vmul.f32 %v1135, %v1578
      %v1621 = vmul.f32 %v1140, %v1578
      %v1622 = vmul.f32 %v1145, %v1578
      %v1623 = vmul.f32 %v1150, %v1578
      %v1624 = vmul.f32 %v1155, %v1578
      %v1625 = vmul.f32 %v1160, %v1578
      %v1626 = vmul.f32 %v1165, %v1578
      %v1627 = vmul.f32 %v1170, %v1578
      %v1628 = vmul.f32 %v1175, %v1578
      %v1629 = vmul.f32 %v1180, %v1578
      %v1630 = vmul.f32 %v1185, %v1578
      %v1631 = vmul.f32 %v1190, %v1578
      %v1632 = vmul.f32 %v1195, %v1578
      %v1633 = vmul.f32 %v1200, %v1578
      %v1634 = vmul.f32 %v1205, %v1578
      %v1635 = vmul.f32 %v1210, %v1578
      %v1636 = vmul.f32 %v1215, %v1578
      %v1637 = vmul.f32 %v1220, %v1578
      %v1638 = vmul.f32 %v1225, %v1578
      %v1639 = vmul.f32 %v1230, %v1578
      %v1640 = vmul.f32 %v1235, %v1578
      %v1641 = vmul.f32 %v1240, %v1578
      %v1642 = vmul.f32 %v1245, %v1578
      %v1643 = vmul.f32 %v1250, %v1578
      %v1644 = vmul.f32 %v1255, %v1578
      %v1645 = vmul.f32 %v1260, %v1578
      %v1646 = vmul.f32 %v1265, %v1578
      %v1647 = vmul.f32 %v1270, %v1578
      %v1648 = vmul.f32 %v1275, %v1578
      %v1649 = vmul.f32 %v1280, %v1578
      %v1650 = vmul.f32 %v1285, %v1578
      %v1651 = vmul.f32 %v1290, %v1578
      %v1652 = vmul.f32 %v1295, %v1578
      %v1653 = vmul.f32 %v1300, %v1578
      %v1654 = vmul.f32 %v1305, %v1578
      %v1655 = vmul.f32 %v1310, %v1578
      %v1656 = vmul.f32 %v1315, %v1578
      %v1657 = vmul.f32 %v1320, %v1578
      %v1658 = vmul.f32 %v1325, %v1578
      %v1659 = vmul.f32 %v1330, %v1578
      %v1660 = vmul.f32 %v1335, %v1578
      %v1661 = vmul.f32 %v1340, %v1578
      %v1662 = vmul.f32 %v1345, %v1578
      %v1663 = vmul.f32 %v1350, %v1578
      %v1664 = vmul.f32 %v1355, %v1578
      %v1665 = vmul.f32 %v1360, %v1578
      %v1666 = vmul.f32 %v1365, %v1578
      %v1667 = vmul.f32 %v1370, %v1578
      %v1668 = vmul.f32 %v1375, %v1578
      %v1669 = vmul.f32 %v1380, %v1578
      %v1670 = vmul.f32 %v1385, %v1578
      %v1671 = vmul.f32 %v1390, %v1578
      %v1672 = vmul.f32 %v1395, %v1578
      %v1673 = vmul.f32 %v1400, %v1578
      %v1674 = vmul.f32 %v1405, %v1578
      %v1675 = vmul.f32 %v1410, %v1578
      %v1676 = vmul.f32 %v1415, %v1578
      %v1677 = vmul.f32 %v1420, %v1578
      %v1678 = vmul.f32 %v1425, %v1578
      %v1679 = vmul.f32 %v1430, %v1578
      %v1680 = vmul.f32 %v1435, %v1578
      %v1681 = vmul.f32 %v1440, %v1578
      %v1682 = vmul.f32 %v1445, %v1578
      %v1683 = vmul.f32 %v1450, %v1578
      %v1684 = vmul.f32 %v1455, %v1578
      %v1685 = vmul.f32 %v1460, %v1578
      %v1686 = vmul.f32 %v1465, %v1578
      %v1687 = vmul.f32 %v1470, %v1578
      %v1688 = vmul.f32 %v1475, %v1578
      %v1689 = vmul.f32 %v1480, %v1578
      %v1690 = vmul.f32 %v1485, %v1578
      %v1691 = vmul.f32 %v1490, %v1578
      %v1692 = vmul.f32 %v1495, %v1578
      %v1693 = vmul.f32 %v1500, %v1578
      %v1694 = vmul.f32 %v1505, %v1578
      %v1695 = vmul.f32 %v1510, %v1578
      %v1696 = vmul.f32 %v1515, %v1578
      %v1697 = vmul.f32 %v1520, %v1578
      %v1698 = vmul.f32 %v1525, %v1578
      %v1699 = vmul.f32 %v1530, %v1578
      %v1700 = vmul.f32 %v1535, %v1578
      %v1701 = vmul.f32 %v1540, %v1578
      %v1702 = vmul.f32 %v1545, %v1578
      %v1703 = vmul.f32 %v1550, %v1578
      %v1704 = vmul.f32 %v1555, %v1578
      %v1705 = vmul.f32 %v1560, %v1578
      %v1706 = vmul.f32 %v1565, %v1578
      %v1707 = vmul.f32 %v1570, %v1578
      %v1708 = vld [vmem:[%s3] sm:$0x1]
      %v1710 = vlaneseq
      %v1711 = vshrl.u32 %v1710, 7
      %v1712 = vsub.s32 0, %v1711
      %v1713 = vrot.slane %v1708, %v1712
      %v1715 = vadd.f32 %v1580, %v1713
      %v1716 = vadd.f32 %v1581, %v1713
      %v1717 = vadd.f32 %v1582, %v1713
      %v1718 = vadd.f32 %v1583, %v1713
      %v1719 = vadd.f32 %v1584, %v1713
      %v1720 = vadd.f32 %v1585, %v1713
      %v1721 = vadd.f32 %v1586, %v1713
      %v1722 = vadd.f32 %v1587, %v1713
      %v1723 = vadd.f32 %v1588, %v1713
      %v1724 = vadd.f32 %v1589, %v1713
      %v1725 = vadd.f32 %v1590, %v1713
      %v1726 = vadd.f32 %v1591, %v1713
      %v1727 = vadd.f32 %v1592, %v1713
      %v1728 = vadd.f32 %v1593, %v1713
      %v1729 = vadd.f32 %v1594, %v1713
      %v1730 = vadd.f32 %v1595, %v1713
      %v1731 = vadd.f32 %v1596, %v1713
      %v1732 = vadd.f32 %v1597, %v1713
      %v1733 = vadd.f32 %v1598, %v1713
      %v1734 = vadd.f32 %v1599, %v1713
      %v1735 = vadd.f32 %v1600, %v1713
      %v1736 = vadd.f32 %v1601, %v1713
      %v1737 = vadd.f32 %v1602, %v1713
      %v1738 = vadd.f32 %v1603, %v1713
      %v1739 = vadd.f32 %v1604, %v1713
      %v1740 = vadd.f32 %v1605, %v1713
      %v1741 = vadd.f32 %v1606, %v1713
      %v1742 = vadd.f32 %v1607, %v1713
      %v1743 = vadd.f32 %v1608, %v1713
      %v1744 = vadd.f32 %v1609, %v1713
      %v1745 = vadd.f32 %v1610, %v1713
      %v1746 = vadd.f32 %v1611, %v1713
      %v1747 = vadd.f32 %v1612, %v1713
      %v1748 = vadd.f32 %v1613, %v1713
      %v1749 = vadd.f32 %v1614, %v1713
      %v1750 = vadd.f32 %v1615, %v1713
      %v1751 = vadd.f32 %v1616, %v1713
      %v1752 = vadd.f32 %v1617, %v1713
      %v1753 = vadd.f32 %v1618, %v1713
      %v1754 = vadd.f32 %v1619, %v1713
      %v1755 = vadd.f32 %v1620, %v1713
      %v1756 = vadd.f32 %v1621, %v1713
      %v1757 = vadd.f32 %v1622, %v1713
      %v1758 = vadd.f32 %v1623, %v1713
      %v1759 = vadd.f32 %v1624, %v1713
      %v1760 = vadd.f32 %v1625, %v1713
      %v1761 = vadd.f32 %v1626, %v1713
      %v1762 = vadd.f32 %v1627, %v1713
      %v1763 = vadd.f32 %v1628, %v1713
      %v1764 = vadd.f32 %v1629, %v1713
      %v1765 = vadd.f32 %v1630, %v1713
      %v1766 = vadd.f32 %v1631, %v1713
      %v1767 = vadd.f32 %v1632, %v1713
      %v1768 = vadd.f32 %v1633, %v1713
      %v1769 = vadd.f32 %v1634, %v1713
      %v1770 = vadd.f32 %v1635, %v1713
      %v1771 = vadd.f32 %v1636, %v1713
      %v1772 = vadd.f32 %v1637, %v1713
      %v1773 = vadd.f32 %v1638, %v1713
      %v1774 = vadd.f32 %v1639, %v1713
      %v1775 = vadd.f32 %v1640, %v1713
      %v1776 = vadd.f32 %v1641, %v1713
      %v1777 = vadd.f32 %v1642, %v1713
      %v1778 = vadd.f32 %v1643, %v1713
      %v1779 = vadd.f32 %v1644, %v1713
      %v1780 = vadd.f32 %v1645, %v1713
      %v1781 = vadd.f32 %v1646, %v1713
      %v1782 = vadd.f32 %v1647, %v1713
      %v1783 = vadd.f32 %v1648, %v1713
      %v1784 = vadd.f32 %v1649, %v1713
      %v1785 = vadd.f32 %v1650, %v1713
      %v1786 = vadd.f32 %v1651, %v1713
      %v1787 = vadd.f32 %v1652, %v1713
      %v1788 = vadd.f32 %v1653, %v1713
      %v1789 = vadd.f32 %v1654, %v1713
      %v1790 = vadd.f32 %v1655, %v1713
      %v1791 = vadd.f32 %v1656, %v1713
      %v1792 = vadd.f32 %v1657, %v1713
      %v1793 = vadd.f32 %v1658, %v1713
      %v1794 = vadd.f32 %v1659, %v1713
      %v1795 = vadd.f32 %v1660, %v1713
      %v1796 = vadd.f32 %v1661, %v1713
      %v1797 = vadd.f32 %v1662, %v1713
      %v1798 = vadd.f32 %v1663, %v1713
      %v1799 = vadd.f32 %v1664, %v1713
      %v1800 = vadd.f32 %v1665, %v1713
      %v1801 = vadd.f32 %v1666, %v1713
      %v1802 = vadd.f32 %v1667, %v1713
      %v1803 = vadd.f32 %v1668, %v1713
      %v1804 = vadd.f32 %v1669, %v1713
      %v1805 = vadd.f32 %v1670, %v1713
      %v1806 = vadd.f32 %v1671, %v1713
      %v1807 = vadd.f32 %v1672, %v1713
      %v1808 = vadd.f32 %v1673, %v1713
      %v1809 = vadd.f32 %v1674, %v1713
      %v1810 = vadd.f32 %v1675, %v1713
      %v1811 = vadd.f32 %v1676, %v1713
      %v1812 = vadd.f32 %v1677, %v1713
      %v1813 = vadd.f32 %v1678, %v1713
      %v1814 = vadd.f32 %v1679, %v1713
      %v1815 = vadd.f32 %v1680, %v1713
      %v1816 = vadd.f32 %v1681, %v1713
      %v1817 = vadd.f32 %v1682, %v1713
      %v1818 = vadd.f32 %v1683, %v1713
      %v1819 = vadd.f32 %v1684, %v1713
      %v1820 = vadd.f32 %v1685, %v1713
      %v1821 = vadd.f32 %v1686, %v1713
      %v1822 = vadd.f32 %v1687, %v1713
      %v1823 = vadd.f32 %v1688, %v1713
      %v1824 = vadd.f32 %v1689, %v1713
      %v1825 = vadd.f32 %v1690, %v1713
      %v1826 = vadd.f32 %v1691, %v1713
      %v1827 = vadd.f32 %v1692, %v1713
      %v1828 = vadd.f32 %v1693, %v1713
      %v1829 = vadd.f32 %v1694, %v1713
      %v1830 = vadd.f32 %v1695, %v1713
      %v1831 = vadd.f32 %v1696, %v1713
      %v1832 = vadd.f32 %v1697, %v1713
      %v1833 = vadd.f32 %v1698, %v1713
      %v1834 = vadd.f32 %v1699, %v1713
      %v1835 = vadd.f32 %v1700, %v1713
      %v1836 = vadd.f32 %v1701, %v1713
      %v1837 = vadd.f32 %v1702, %v1713
      %v1838 = vadd.f32 %v1703, %v1713
      %v1839 = vadd.f32 %v1704, %v1713
      %v1840 = vadd.f32 %v1705, %v1713
      %v1841 = vadd.f32 %v1706, %v1713
      %v1842 = vadd.f32 %v1707, %v1713
      %v1843 = vmax.f32 %v1715, 0.0
      %v1844 = vmax.f32 %v1716, 0.0
      %v1845 = vmax.f32 %v1717, 0.0
      %v1846 = vmax.f32 %v1718, 0.0
      %v1847 = vmax.f32 %v1719, 0.0
      %v1848 = vmax.f32 %v1720, 0.0
      %v1849 = vmax.f32 %v1721, 0.0
      %v1850 = vmax.f32 %v1722, 0.0
      %v1851 = vmax.f32 %v1723, 0.0
      %v1852 = vmax.f32 %v1724, 0.0
      %v1853 = vmax.f32 %v1725, 0.0
      %v1854 = vmax.f32 %v1726, 0.0
      %v1855 = vmax.f32 %v1727, 0.0
      %v1856 = vmax.f32 %v1728, 0.0
      %v1857 = vmax.f32 %v1729, 0.0
      %v1858 = vmax.f32 %v1730, 0.0
      %v1859 = vmax.f32 %v1731, 0.0
      %v1860 = vmax.f32 %v1732, 0.0
      %v1861 = vmax.f32 %v1733, 0.0
      %v1862 = vmax.f32 %v1734, 0.0
      %v1863 = vmax.f32 %v1735, 0.0
      %v1864 = vmax.f32 %v1736, 0.0
      %v1865 = vmax.f32 %v1737, 0.0
      %v1866 = vmax.f32 %v1738, 0.0
      %v1867 = vmax.f32 %v1739, 0.0
      %v1868 = vmax.f32 %v1740, 0.0
      %v1869 = vmax.f32 %v1741, 0.0
      %v1870 = vmax.f32 %v1742, 0.0
      %v1871 = vmax.f32 %v1743, 0.0
      %v1872 = vmax.f32 %v1744, 0.0
      %v1873 = vmax.f32 %v1745, 0.0
      %v1874 = vmax.f32 %v1746, 0.0
      %v1875 = vmax.f32 %v1747, 0.0
      %v1876 = vmax.f32 %v1748, 0.0
      %v1877 = vmax.f32 %v1749, 0.0
      %v1878 = vmax.f32 %v1750, 0.0
      %v1879 = vmax.f32 %v1751, 0.0
      %v1880 = vmax.f32 %v1752, 0.0
      %v1881 = vmax.f32 %v1753, 0.0
      %v1882 = vmax.f32 %v1754, 0.0
      %v1883 = vmax.f32 %v1755, 0.0
      %v1884 = vmax.f32 %v1756, 0.0
      %v1885 = vmax.f32 %v1757, 0.0
      %v1886 = vmax.f32 %v1758, 0.0
      %v1887 = vmax.f32 %v1759, 0.0
      %v1888 = vmax.f32 %v1760, 0.0
      %v1889 = vmax.f32 %v1761, 0.0
      %v1890 = vmax.f32 %v1762, 0.0
      %v1891 = vmax.f32 %v1763, 0.0
      %v1892 = vmax.f32 %v1764, 0.0
      %v1893 = vmax.f32 %v1765, 0.0
      %v1894 = vmax.f32 %v1766, 0.0
      %v1895 = vmax.f32 %v1767, 0.0
      %v1896 = vmax.f32 %v1768, 0.0
      %v1897 = vmax.f32 %v1769, 0.0
      %v1898 = vmax.f32 %v1770, 0.0
      %v1899 = vmax.f32 %v1771, 0.0
      %v1900 = vmax.f32 %v1772, 0.0
      %v1901 = vmax.f32 %v1773, 0.0
      %v1902 = vmax.f32 %v1774, 0.0
      %v1903 = vmax.f32 %v1775, 0.0
      %v1904 = vmax.f32 %v1776, 0.0
      %v1905 = vmax.f32 %v1777, 0.0
      %v1906 = vmax.f32 %v1778, 0.0
      %v1907 = vmax.f32 %v1779, 0.0
      %v1908 = vmax.f32 %v1780, 0.0
      %v1909 = vmax.f32 %v1781, 0.0
      %v1910 = vmax.f32 %v1782, 0.0
      %v1911 = vmax.f32 %v1783, 0.0
      %v1912 = vmax.f32 %v1784, 0.0
      %v1913 = vmax.f32 %v1785, 0.0
      %v1914 = vmax.f32 %v1786, 0.0
      %v1915 = vmax.f32 %v1787, 0.0
      %v1916 = vmax.f32 %v1788, 0.0
      %v1917 = vmax.f32 %v1789, 0.0
      %v1918 = vmax.f32 %v1790, 0.0
      %v1919 = vmax.f32 %v1791, 0.0
      %v1920 = vmax.f32 %v1792, 0.0
      %v1921 = vmax.f32 %v1793, 0.0
      %v1922 = vmax.f32 %v1794, 0.0
      %v1923 = vmax.f32 %v1795, 0.0
      %v1924 = vmax.f32 %v1796, 0.0
      %v1925 = vmax.f32 %v1797, 0.0
      %v1926 = vmax.f32 %v1798, 0.0
      %v1927 = vmax.f32 %v1799, 0.0
      %v1928 = vmax.f32 %v1800, 0.0
      %v1929 = vmax.f32 %v1801, 0.0
      %v1930 = vmax.f32 %v1802, 0.0
      %v1931 = vmax.f32 %v1803, 0.0
      %v1932 = vmax.f32 %v1804, 0.0
      %v1933 = vmax.f32 %v1805, 0.0
      %v1934 = vmax.f32 %v1806, 0.0
      %v1935 = vmax.f32 %v1807, 0.0
      %v1936 = vmax.f32 %v1808, 0.0
      %v1937 = vmax.f32 %v1809, 0.0
      %v1938 = vmax.f32 %v1810, 0.0
      %v1939 = vmax.f32 %v1811, 0.0
      %v1940 = vmax.f32 %v1812, 0.0
      %v1941 = vmax.f32 %v1813, 0.0
      %v1942 = vmax.f32 %v1814, 0.0
      %v1943 = vmax.f32 %v1815, 0.0
      %v1944 = vmax.f32 %v1816, 0.0
      %v1945 = vmax.f32 %v1817, 0.0
      %v1946 = vmax.f32 %v1818, 0.0
      %v1947 = vmax.f32 %v1819, 0.0
      %v1948 = vmax.f32 %v1820, 0.0
      %v1949 = vmax.f32 %v1821, 0.0
      %v1950 = vmax.f32 %v1822, 0.0
      %v1951 = vmax.f32 %v1823, 0.0
      %v1952 = vmax.f32 %v1824, 0.0
      %v1953 = vmax.f32 %v1825, 0.0
      %v1954 = vmax.f32 %v1826, 0.0
      %v1955 = vmax.f32 %v1827, 0.0
      %v1956 = vmax.f32 %v1828, 0.0
      %v1957 = vmax.f32 %v1829, 0.0
      %v1958 = vmax.f32 %v1830, 0.0
      %v1959 = vmax.f32 %v1831, 0.0
      %v1960 = vmax.f32 %v1832, 0.0
      %v1961 = vmax.f32 %v1833, 0.0
      %v1962 = vmax.f32 %v1834, 0.0
      %v1963 = vmax.f32 %v1835, 0.0
      %v1964 = vmax.f32 %v1836, 0.0
      %v1965 = vmax.f32 %v1837, 0.0
      %v1966 = vmax.f32 %v1838, 0.0
      %v1967 = vmax.f32 %v1839, 0.0
      %v1968 = vmax.f32 %v1840, 0.0
      %v1969 = vmax.f32 %v1841, 0.0
      %v1970 = vmax.f32 %v1842, 0.0
      %vm1971 = vcmask 523264
      %1972 = vst.msk [vmem:[%s202] sm:$0xff] %vm1971, %v1843
      %1973 = vst.msk [vmem:[%s202 + $0x8] sm:$0xff] %vm1971, %v1844
      %1974 = vst.msk [vmem:[%s202 + $0x10] sm:$0xff] %vm1971, %v1845
      %1975 = vst.msk [vmem:[%s202 + $0x18] sm:$0xff] %vm1971, %v1846
      %1976 = vst.msk [vmem:[%s202 + $0x20] sm:$0xff] %vm1971, %v1847
      %1977 = vst.msk [vmem:[%s202 + $0x28] sm:$0xff] %vm1971, %v1848
      %1978 = vst.msk [vmem:[%s202 + $0x30] sm:$0xff] %vm1971, %v1849
      %1979 = vst.msk [vmem:[%s202 + $0x38] sm:$0xff] %vm1971, %v1850
      %1980 = vst.msk [vmem:[%s202 + $0x40] sm:$0xff] %vm1971, %v1851
      %1981 = vst.msk [vmem:[%s202 + $0x48] sm:$0xff] %vm1971, %v1852
      %1982 = vst.msk [vmem:[%s202 + $0x50] sm:$0xff] %vm1971, %v1853
      %1983 = vst.msk [vmem:[%s202 + $0x58] sm:$0xff] %vm1971, %v1854
      %1984 = vst.msk [vmem:[%s202 + $0x60] sm:$0xff] %vm1971, %v1855
      %1985 = vst.msk [vmem:[%s202 + $0x68] sm:$0xff] %vm1971, %v1856
      %1986 = vst.msk [vmem:[%s202 + $0x70] sm:$0xff] %vm1971, %v1857
      %1987 = vst.msk [vmem:[%s202 + $0x78] sm:$0xff] %vm1971, %v1858
      %1988 = vst.msk [vmem:[%s202 + $0x80] sm:$0xff] %vm1971, %v1859
      %1989 = vst.msk [vmem:[%s202 + $0x88] sm:$0xff] %vm1971, %v1860
      %1990 = vst.msk [vmem:[%s202 + $0x90] sm:$0xff] %vm1971, %v1861
      %1991 = vst.msk [vmem:[%s202 + $0x98] sm:$0xff] %vm1971, %v1862
      %1992 = vst.msk [vmem:[%s202 + $0xa0] sm:$0xff] %vm1971, %v1863
      %1993 = vst.msk [vmem:[%s202 + $0xa8] sm:$0xff] %vm1971, %v1864
      %1994 = vst.msk [vmem:[%s202 + $0xb0] sm:$0xff] %vm1971, %v1865
      %1995 = vst.msk [vmem:[%s202 + $0xb8] sm:$0xff] %vm1971, %v1866
      %1996 = vst.msk [vmem:[%s202 + $0xc0] sm:$0xff] %vm1971, %v1867
      %1997 = vst.msk [vmem:[%s202 + $0xc8] sm:$0xff] %vm1971, %v1868
      %1998 = vst.msk [vmem:[%s202 + $0xd0] sm:$0xff] %vm1971, %v1869
      %1999 = vst.msk [vmem:[%s202 + $0xd8] sm:$0xff] %vm1971, %v1870
      %2000 = vst.msk [vmem:[%s202 + $0xe0] sm:$0xff] %vm1971, %v1871
      %2001 = vst.msk [vmem:[%s202 + $0xe8] sm:$0xff] %vm1971, %v1872
      %2002 = vst.msk [vmem:[%s202 + $0xf0] sm:$0xff] %vm1971, %v1873
      %2003 = vst.msk [vmem:[%s202 + $0xf8] sm:$0xff] %vm1971, %v1874
      %2004 = vst.msk [vmem:[%s202 + $0x100] sm:$0xff] %vm1971, %v1875
      %2005 = vst.msk [vmem:[%s202 + $0x108] sm:$0xff] %vm1971, %v1876
      %2006 = vst.msk [vmem:[%s202 + $0x110] sm:$0xff] %vm1971, %v1877
      %2007 = vst.msk [vmem:[%s202 + $0x118] sm:$0xff] %vm1971, %v1878
      %2008 = vst.msk [vmem:[%s202 + $0x120] sm:$0xff] %vm1971, %v1879
      %2009 = vst.msk [vmem:[%s202 + $0x128] sm:$0xff] %vm1971, %v1880
      %2010 = vst.msk [vmem:[%s202 + $0x130] sm:$0xff] %vm1971, %v1881
      %2011 = vst.msk [vmem:[%s202 + $0x138] sm:$0xff] %vm1971, %v1882
      %2012 = vst.msk [vmem:[%s202 + $0x140] sm:$0xff] %vm1971, %v1883
      %2013 = vst.msk [vmem:[%s202 + $0x148] sm:$0xff] %vm1971, %v1884
      %2014 = vst.msk [vmem:[%s202 + $0x150] sm:$0xff] %vm1971, %v1885
      %2015 = vst.msk [vmem:[%s202 + $0x158] sm:$0xff] %vm1971, %v1886
      %2016 = vst.msk [vmem:[%s202 + $0x160] sm:$0xff] %vm1971, %v1887
      %2017 = vst.msk [vmem:[%s202 + $0x168] sm:$0xff] %vm1971, %v1888
      %2018 = vst.msk [vmem:[%s202 + $0x170] sm:$0xff] %vm1971, %v1889
      %2019 = vst.msk [vmem:[%s202 + $0x178] sm:$0xff] %vm1971, %v1890
      %2020 = vst.msk [vmem:[%s202 + $0x180] sm:$0xff] %vm1971, %v1891
      %2021 = vst.msk [vmem:[%s202 + $0x188] sm:$0xff] %vm1971, %v1892
      %2022 = vst.msk [vmem:[%s202 + $0x190] sm:$0xff] %vm1971, %v1893
      %2023 = vst.msk [vmem:[%s202 + $0x198] sm:$0xff] %vm1971, %v1894
      %2024 = vst.msk [vmem:[%s202 + $0x1a0] sm:$0xff] %vm1971, %v1895
      %2025 = vst.msk [vmem:[%s202 + $0x1a8] sm:$0xff] %vm1971, %v1896
      %2026 = vst.msk [vmem:[%s202 + $0x1b0] sm:$0xff] %vm1971, %v1897
      %2027 = vst.msk [vmem:[%s202 + $0x1b8] sm:$0xff] %vm1971, %v1898
      %2028 = vst.msk [vmem:[%s202 + $0x1c0] sm:$0xff] %vm1971, %v1899
      %2029 = vst.msk [vmem:[%s202 + $0x1c8] sm:$0xff] %vm1971, %v1900
      %2030 = vst.msk [vmem:[%s202 + $0x1d0] sm:$0xff] %vm1971, %v1901
      %2031 = vst.msk [vmem:[%s202 + $0x1d8] sm:$0xff] %vm1971, %v1902
      %2032 = vst.msk [vmem:[%s202 + $0x1e0] sm:$0xff] %vm1971, %v1903
      %2033 = vst.msk [vmem:[%s202 + $0x1e8] sm:$0xff] %vm1971, %v1904
      %2034 = vst.msk [vmem:[%s202 + $0x1f0] sm:$0xff] %vm1971, %v1905
      %2035 = vst.msk [vmem:[%s202 + $0x1f8] sm:$0xff] %vm1971, %v1906
      %2036 = vst.msk [vmem:[%s202 + $0x200] sm:$0xff] %vm1971, %v1907
      %2037 = vst.msk [vmem:[%s202 + $0x208] sm:$0xff] %vm1971, %v1908
      %2038 = vst.msk [vmem:[%s202 + $0x210] sm:$0xff] %vm1971, %v1909
      %2039 = vst.msk [vmem:[%s202 + $0x218] sm:$0xff] %vm1971, %v1910
      %2040 = vst.msk [vmem:[%s202 + $0x220] sm:$0xff] %vm1971, %v1911
      %2041 = vst.msk [vmem:[%s202 + $0x228] sm:$0xff] %vm1971, %v1912
      %2042 = vst.msk [vmem:[%s202 + $0x230] sm:$0xff] %vm1971, %v1913
      %2043 = vst.msk [vmem:[%s202 + $0x238] sm:$0xff] %vm1971, %v1914
      %2044 = vst.msk [vmem:[%s202 + $0x240] sm:$0xff] %vm1971, %v1915
      %2045 = vst.msk [vmem:[%s202 + $0x248] sm:$0xff] %vm1971, %v1916
      %2046 = vst.msk [vmem:[%s202 + $0x250] sm:$0xff] %vm1971, %v1917
      %2047 = vst.msk [vmem:[%s202 + $0x258] sm:$0xff] %vm1971, %v1918
      %2048 = vst.msk [vmem:[%s202 + $0x260] sm:$0xff] %vm1971, %v1919
      %2049 = vst.msk [vmem:[%s202 + $0x268] sm:$0xff] %vm1971, %v1920
      %2050 = vst.msk [vmem:[%s202 + $0x270] sm:$0xff] %vm1971, %v1921
      %2051 = vst.msk [vmem:[%s202 + $0x278] sm:$0xff] %vm1971, %v1922
      %2052 = vst.msk [vmem:[%s202 + $0x280] sm:$0xff] %vm1971, %v1923
      %2053 = vst.msk [vmem:[%s202 + $0x288] sm:$0xff] %vm1971, %v1924
      %2054 = vst.msk [vmem:[%s202 + $0x290] sm:$0xff] %vm1971, %v1925
      %2055 = vst.msk [vmem:[%s202 + $0x298] sm:$0xff] %vm1971, %v1926
      %2056 = vst.msk [vmem:[%s202 + $0x2a0] sm:$0xff] %vm1971, %v1927
      %2057 = vst.msk [vmem:[%s202 + $0x2a8] sm:$0xff] %vm1971, %v1928
      %2058 = vst.msk [vmem:[%s202 + $0x2b0] sm:$0xff] %vm1971, %v1929
      %2059 = vst.msk [vmem:[%s202 + $0x2b8] sm:$0xff] %vm1971, %v1930
      %2060 = vst.msk [vmem:[%s202 + $0x2c0] sm:$0xff] %vm1971, %v1931
      %2061 = vst.msk [vmem:[%s202 + $0x2c8] sm:$0xff] %vm1971, %v1932
      %2062 = vst.msk [vmem:[%s202 + $0x2d0] sm:$0xff] %vm1971, %v1933
      %2063 = vst.msk [vmem:[%s202 + $0x2d8] sm:$0xff] %vm1971, %v1934
      %2064 = vst.msk [vmem:[%s202 + $0x2e0] sm:$0xff] %vm1971, %v1935
      %2065 = vst.msk [vmem:[%s202 + $0x2e8] sm:$0xff] %vm1971, %v1936
      %2066 = vst.msk [vmem:[%s202 + $0x2f0] sm:$0xff] %vm1971, %v1937
      %2067 = vst.msk [vmem:[%s202 + $0x2f8] sm:$0xff] %vm1971, %v1938
      %2068 = vst.msk [vmem:[%s202 + $0x300] sm:$0xff] %vm1971, %v1939
      %2069 = vst.msk [vmem:[%s202 + $0x308] sm:$0xff] %vm1971, %v1940
      %2070 = vst.msk [vmem:[%s202 + $0x310] sm:$0xff] %vm1971, %v1941
      %2071 = vst.msk [vmem:[%s202 + $0x318] sm:$0xff] %vm1971, %v1942
      %2072 = vst.msk [vmem:[%s202 + $0x320] sm:$0xff] %vm1971, %v1943
      %2073 = vst.msk [vmem:[%s202 + $0x328] sm:$0xff] %vm1971, %v1944
      %2074 = vst.msk [vmem:[%s202 + $0x330] sm:$0xff] %vm1971, %v1945
      %2075 = vst.msk [vmem:[%s202 + $0x338] sm:$0xff] %vm1971, %v1946
      %2076 = vst.msk [vmem:[%s202 + $0x340] sm:$0xff] %vm1971, %v1947
      %2077 = vst.msk [vmem:[%s202 + $0x348] sm:$0xff] %vm1971, %v1948
      %2078 = vst.msk [vmem:[%s202 + $0x350] sm:$0xff] %vm1971, %v1949
      %2079 = vst.msk [vmem:[%s202 + $0x358] sm:$0xff] %vm1971, %v1950
      %2080 = vst.msk [vmem:[%s202 + $0x360] sm:$0xff] %vm1971, %v1951
      %2081 = vst.msk [vmem:[%s202 + $0x368] sm:$0xff] %vm1971, %v1952
      %2082 = vst.msk [vmem:[%s202 + $0x370] sm:$0xff] %vm1971, %v1953
      %2083 = vst.msk [vmem:[%s202 + $0x378] sm:$0xff] %vm1971, %v1954
      %2084 = vst.msk [vmem:[%s202 + $0x380] sm:$0xff] %vm1971, %v1955
      %2085 = vst.msk [vmem:[%s202 + $0x388] sm:$0xff] %vm1971, %v1956
      %2086 = vst.msk [vmem:[%s202 + $0x390] sm:$0xff] %vm1971, %v1957
      %2087 = vst.msk [vmem:[%s202 + $0x398] sm:$0xff] %vm1971, %v1958
      %2088 = vst.msk [vmem:[%s202 + $0x3a0] sm:$0xff] %vm1971, %v1959
      %2089 = vst.msk [vmem:[%s202 + $0x3a8] sm:$0xff] %vm1971, %v1960
      %2090 = vst.msk [vmem:[%s202 + $0x3b0] sm:$0xff] %vm1971, %v1961
      %2091 = vst.msk [vmem:[%s202 + $0x3b8] sm:$0xff] %vm1971, %v1962
      %2092 = vst.msk [vmem:[%s202 + $0x3c0] sm:$0xff] %vm1971, %v1963
      %2093 = vst.msk [vmem:[%s202 + $0x3c8] sm:$0xff] %vm1971, %v1964
      %2094 = vst.msk [vmem:[%s202 + $0x3d0] sm:$0xff] %vm1971, %v1965
      %2095 = vst.msk [vmem:[%s202 + $0x3d8] sm:$0xff] %vm1971, %v1966
      %2096 = vst.msk [vmem:[%s202 + $0x3e0] sm:$0xff] %vm1971, %v1967
      %2097 = vst.msk [vmem:[%s202 + $0x3e8] sm:$0xff] %vm1971, %v1968
      %2098 = vst.msk [vmem:[%s202 + $0x3f0] sm:$0xff] %vm1971, %v1969
      %2099 = vst.msk [vmem:[%s202 + $0x3f8] sm:$0xff] %vm1971, %v1970
      %s2100 = smul.u32 128, %s15
      %p2101 = scmp.lt.s32.totalorder %s2100, 255
      %s2102 = scalar_select %p2101, %s2100, 255
      %s2103 = smul.addr %s2102, 8
      %s2104 = scalar_lea.vmem %s4, %s2103
      // Predicated region
      $region37: #{tpu_custom_call.1} parent=35 // pred_check
        %p2105 = pneg %p122
      $region38: #{tpu_custom_call.1} parent=35 // pred_check_branch
        %2107 = sbr.rel (%p2105) target = $region40
      $region39: #{tpu_custom_call.1} parent=35 // pred_region
        %s2108 = smul.u32 128, %s15
      $region40: #{tpu_custom_call.1} parent=35 // pred_fallthru
        _
    $region36: #{tpu_custom_call.1} parent=5 // pred_fallthru
      _
    %p2109 = scmp.le.s32.totalorder 2, %s10
    // Predicated region
    $region41: #{tpu_custom_call.1} parent=5 // pred_check
      %p2110 = pneg %p2109
    $region42: #{tpu_custom_call.1} parent=5 // pred_check_branch
      %2112 = sbr.rel (%p2110) target = $region44
    $region43: #{tpu_custom_call.1} parent=5 // pred_region
      %s2113 = ssub.s32 %s10, 2
      // Predicated region
      $region45: #{tpu_custom_call.1} parent=43 // pred_check
        %p2114 = pneg %p128
      $region46: #{tpu_custom_call.1} parent=43 // pred_check_branch
        %2116 = sbr.rel (%p2114) target = $region48
      $region47: #{tpu_custom_call.1} parent=43 // pred_region
        %s2117 = smul.u32 128, %s16
        %p2118 = scmp.lt.s32.totalorder %s2117, 255
        %s2119 = scalar_select %p2118, %s2117, 255
        %s2120 = smul.addr %s2119, 8
        %s2121 = scalar_lea.vmem %s4, %s2120
      $region48: #{tpu_custom_call.1} parent=43 // pred_fallthru
        _
    $region44: #{tpu_custom_call.1} parent=5 // pred_fallthru
      _
  $region6: #{tpu_custom_call.1} parent=0 // loop_footer
    %s14 = sadd.s32 1, %s10
  $region7: #{tpu_custom_call.1} parent=0 // loop_footer_branch
    %9 = sbr.rel target = $region3
  $region8: #{tpu_custom_call.1} parent=0 // loop_exit
    _

</llo_original>
